<compile_context>
chip_gen: v7x
topology: tpu7x:2x2x1
jax: 0.10.0
libtpu: 0.0.40
codegen_flags: <defaults>
</compile_context>

<pallas_src>
import jax
import jax.numpy as jnp
from jax.experimental import pallas as pl
from jax.experimental.pallas import tpu as pltpu


def attn_v_kernel(attn_ref, v_ref, o_ref):
    # attn_ref : (H, tq, L)  -- all heads, one query-row tile
    # v_ref    : (H, L,  D)  -- all heads, full key length (resident across tiles)
    # o_ref    : (tq, H*D)   -- contiguous output slab
    H = attn_ref.shape[0]
    D = v_ref.shape[-1]
    # Head pairs -> 128-lane-wide, 128-aligned unmasked stores (D = 64).
    for j in range(H // 2):
        h0 = jnp.dot(attn_ref[2 * j], v_ref[2 * j],
                     preferred_element_type=jnp.float32)
        h1 = jnp.dot(attn_ref[2 * j + 1], v_ref[2 * j + 1],
                     preferred_element_type=jnp.float32)
        o_ref[:, (2 * j) * D:(2 * j + 2) * D] = (
            jnp.concatenate([h0, h1], axis=-1).astype(o_ref.dtype))
    if H % 2:  # odd-head fallback (not hit at the benchmark shape)
        h = H - 1
        o_ref[:, h * D:(h + 1) * D] = jnp.dot(
            attn_ref[h], v_ref[h], preferred_element_type=jnp.float32
        ).astype(o_ref.dtype)


def _pick_tq(B, H, L, D, itemsize, budget_bytes=12 << 20):
    """Largest query-row tile (multiple of 8, divisor of L) fitting the VMEM budget."""
    fixed = 2 * H * L * D * itemsize            # v block, double-buffered
    per_row = 2 * H * (L + D) * itemsize        # attn + out blocks, per query row
    cap = max(8, (budget_bytes - fixed) // per_row) if budget_bytes > fixed else 8
    cands = sorted({L} | {t for t in range(8, L, 8) if L % t == 0}, reverse=True)
    tq = next((t for t in cands if t <= cap), cands[-1])
    # v7x has 2 TensorCores: keep >=2 grid steps when possible so neither idles.
    if B == 1 and L // tq == 1:
        for t in cands:
            if t < L and L // t >= 2:
                tq = t
                break
    return tq


def attn_v(attn, v, *, tq=None, out_dtype=None):
    """attn: (B, H, 1, L, L), v: (B, H, 1, L, D) -> (B, L, H*D).

    Dtype-agnostic: pass bf16 attn/v for a bf16-at-the-HBM-boundary pipeline;
    MXU accumulation is always f32.
    """
    B, H, one, L, L2 = attn.shape
    assert one == 1 and L == L2
    D = v.shape[-1]
    out_dtype = attn.dtype if out_dtype is None else out_dtype
    itemsize = jnp.dtype(attn.dtype).itemsize

    if tq is None:
        tq = _pick_tq(B, H, L, D, itemsize)
    assert L % tq == 0

    # Explicit scoped-VMEM limit derived from the actual block sizes.
    attn_blk = H * tq * L * itemsize
    v_blk = H * L * D * itemsize
    out_blk = tq * H * D * jnp.dtype(out_dtype).itemsize
    footprint = 2 * (attn_blk + v_blk + out_blk)          # double-buffered
    vmem_limit = int(min(64 << 20, max(16 << 20, footprint + (8 << 20))))

    out_bytes = B * L * H * D * jnp.dtype(out_dtype).itemsize
    cost = pl.CostEstimate(
        flops=2 * B * H * L * L * D,
        transcendentals=0,
        bytes_accessed=attn.nbytes + v.nbytes + out_bytes,
    )

    return pl.pallas_call(
        attn_v_kernel,
        out_shape=jax.ShapeDtypeStruct((B, L, H * D), out_dtype),
        grid=(B, L // tq),
        in_specs=[
            # All heads, one query-row tile.
            pl.BlockSpec((None, H, None, tq, L), lambda b, i: (b, 0, 0, i, 0)),
            # All heads, full V; index map ignores i -> stays resident across
            # row tiles of the same batch.
            pl.BlockSpec((None, H, None, L, D), lambda b, i: (b, 0, 0, 0, 0)),
        ],
        # Full-width contiguous (tq, H*D) output slab per step.
        out_specs=pl.BlockSpec((None, tq, H * D), lambda b, i: (b, i, 0)),
        compiler_params=pltpu.CompilerParams(
            dimension_semantics=("parallel", "parallel"),
            vmem_limit_bytes=vmem_limit,
        ),
        cost_estimate=cost,
    )(attn, v)


if __name__ == "__main__":
    # Shapes consistent with the module: num_heads=8, head_size=64,
    # model_size=512, batch=2, max_len=128.
    B, H, D, L = 2, 8, 64, 128

    key = jax.random.PRNGKey(0)
    k_attn, k_v = jax.random.split(key)
    scores = jax.random.normal(k_attn, (B, H, 1, L, L), dtype=jnp.float32)
    attn = jax.nn.softmax(scores, axis=-1)  # realistic attention probabilities
    v = jax.random.normal(k_v, (B, H, 1, L, D), dtype=jnp.float32)

    out = jax.block_until_ready(attn_v(attn, v))

    # Pure-JAX reference reproducing the exact PyTorch op sequence.
    ref = jnp.reshape(
        jnp.transpose(jnp.matmul(attn, v), (0, 2, 3, 1, 4)), (B, L, H * D)
    )

    assert out.shape == (B, L, H * D), out.shape
    assert out.dtype == jnp.float32
    assert jnp.allclose(out, ref, atol=1e-4, rtol=1e-4), "mismatch vs reference"

    print("KERNEL_OK")
</pallas_src>

<mosaic_0001>
module attributes {stable_mosaic.version = 11 : i64} {
  func.func @attn_v_kernel(%arg0: i32, %arg1: i32, %arg2: memref<1x8x1x128x128xf32, #tpu.memory_space<vmem>>, %arg3: memref<1x8x1x128x64xf32, #tpu.memory_space<vmem>>, %arg4: memref<1x128x512xf32, #tpu.memory_space<vmem>>) attributes {dimension_semantics = [#tpu.dimension_semantics<parallel>, #tpu.dimension_semantics<parallel>], iteration_bounds = array<i64: 2, 1>, scalar_prefetch = 0 : i64, scratch_operands = 0 : i64, tpu.core_type = #tpu.core_type<tc>, window_params = [{transform_indices = @transform_0, window_bounds = array<i64: 1, 8, 1, 128, 128>}, {transform_indices = @transform_1, window_bounds = array<i64: 1, 8, 1, 128, 64>}, {transform_indices = @transform_2, window_bounds = array<i64: 1, 128, 512>}]} {
    %c0 = arith.constant 0 : index
    %c0_0 = arith.constant 0 : index
    %c0_1 = arith.constant 0 : index
    %c0_2 = arith.constant 0 : index
    %c0_3 = arith.constant 0 : index
    %0 = vector.load %arg2[%c0, %c0_0, %c0_1, %c0_2, %c0_3] : memref<1x8x1x128x128xf32, #tpu.memory_space<vmem>>, vector<1x1x1x128x128xf32>
    %1 = vector.shape_cast %0 : vector<1x1x1x128x128xf32> to vector<128x128xf32>
    %c0_4 = arith.constant 0 : index
    %c0_5 = arith.constant 0 : index
    %c0_6 = arith.constant 0 : index
    %c0_7 = arith.constant 0 : index
    %c0_8 = arith.constant 0 : index
    %2 = vector.load %arg3[%c0_4, %c0_5, %c0_6, %c0_7, %c0_8] : memref<1x8x1x128x64xf32, #tpu.memory_space<vmem>>, vector<1x1x1x128x64xf32>
    %3 = vector.shape_cast %2 : vector<1x1x1x128x64xf32> to vector<128x64xf32>
    %cst = arith.constant dense<0.000000e+00> : vector<128x64xf32>
    %4 = tpu.matmul %1, %3, %cst {dimension_numbers = #tpu.dot_dimension_numbers<[1], [0], [0], [1], [0, 0, 1, 1], [], []>} : vector<128x128xf32>, vector<128x64xf32>, vector<128x64xf32> -> vector<128x64xf32>
    %c0_9 = arith.constant 0 : index
    %c1 = arith.constant 1 : index
    %c0_10 = arith.constant 0 : index
    %c0_11 = arith.constant 0 : index
    %c0_12 = arith.constant 0 : index
    %5 = vector.load %arg2[%c0_9, %c1, %c0_10, %c0_11, %c0_12] : memref<1x8x1x128x128xf32, #tpu.memory_space<vmem>>, vector<1x1x1x128x128xf32>
    %6 = vector.shape_cast %5 : vector<1x1x1x128x128xf32> to vector<128x128xf32>
    %c0_13 = arith.constant 0 : index
    %c1_14 = arith.constant 1 : index
    %c0_15 = arith.constant 0 : index
    %c0_16 = arith.constant 0 : index
    %c0_17 = arith.constant 0 : index
    %7 = vector.load %arg3[%c0_13, %c1_14, %c0_15, %c0_16, %c0_17] : memref<1x8x1x128x64xf32, #tpu.memory_space<vmem>>, vector<1x1x1x128x64xf32>
    %8 = vector.shape_cast %7 : vector<1x1x1x128x64xf32> to vector<128x64xf32>
    %cst_18 = arith.constant dense<0.000000e+00> : vector<128x64xf32>
    %9 = tpu.matmul %6, %8, %cst_18 {dimension_numbers = #tpu.dot_dimension_numbers<[1], [0], [0], [1], [0, 0, 1, 1], [], []>} : vector<128x128xf32>, vector<128x64xf32>, vector<128x64xf32> -> vector<128x64xf32>
    %10 = tpu.concatenate %4, %9 in 1 : vector<128x64xf32>, vector<128x64xf32> -> vector<128x128xf32>
    %c0_19 = arith.constant 0 : index
    %c0_20 = arith.constant 0 : index
    %c0_21 = arith.constant 0 : index
    %11 = vector.load %arg4[%c0_19, %c0_20, %c0_21] : memref<1x128x512xf32, #tpu.memory_space<vmem>>, vector<1x128x128xf32>
    %12 = vector.shape_cast %11 : vector<1x128x128xf32> to vector<128x128xf32>
    %13 = vector.shape_cast %10 : vector<128x128xf32> to vector<1x128x128xf32>
    tpu.vector_store %arg4[%c0_19, %c0_20, %c0_21], %13 {strides = array<i32>} : memref<1x128x512xf32, #tpu.memory_space<vmem>>, vector<1x128x128xf32>,
    %c0_22 = arith.constant 0 : index
    %c2 = arith.constant 2 : index
    %c0_23 = arith.constant 0 : index
    %c0_24 = arith.constant 0 : index
    %c0_25 = arith.constant 0 : index
    %14 = vector.load %arg2[%c0_22, %c2, %c0_23, %c0_24, %c0_25] : memref<1x8x1x128x128xf32, #tpu.memory_space<vmem>>, vector<1x1x1x128x128xf32>
    %15 = vector.shape_cast %14 : vector<1x1x1x128x128xf32> to vector<128x128xf32>
    %c0_26 = arith.constant 0 : index
    %c2_27 = arith.constant 2 : index
    %c0_28 = arith.constant 0 : index
    %c0_29 = arith.constant 0 : index
    %c0_30 = arith.constant 0 : index
    %16 = vector.load %arg3[%c0_26, %c2_27, %c0_28, %c0_29, %c0_30] : memref<1x8x1x128x64xf32, #tpu.memory_space<vmem>>, vector<1x1x1x128x64xf32>
    %17 = vector.shape_cast %16 : vector<1x1x1x128x64xf32> to vector<128x64xf32>
    %cst_31 = arith.constant dense<0.000000e+00> : vector<128x64xf32>
    %18 = tpu.matmul %15, %17, %cst_31 {dimension_numbers = #tpu.dot_dimension_numbers<[1], [0], [0], [1], [0, 0, 1, 1], [], []>} : vector<128x128xf32>, vector<128x64xf32>, vector<128x64xf32> -> vector<128x64xf32>
    %c0_32 = arith.constant 0 : index
    %c3 = arith.constant 3 : index
    %c0_33 = arith.constant 0 : index
    %c0_34 = arith.constant 0 : index
    %c0_35 = arith.constant 0 : index
    %19 = vector.load %arg2[%c0_32, %c3, %c0_33, %c0_34, %c0_35] : memref<1x8x1x128x128xf32, #tpu.memory_space<vmem>>, vector<1x1x1x128x128xf32>
    %20 = vector.shape_cast %19 : vector<1x1x1x128x128xf32> to vector<128x128xf32>
    %c0_36 = arith.constant 0 : index
    %c3_37 = arith.constant 3 : index
    %c0_38 = arith.constant 0 : index
    %c0_39 = arith.constant 0 : index
    %c0_40 = arith.constant 0 : index
    %21 = vector.load %arg3[%c0_36, %c3_37, %c0_38, %c0_39, %c0_40] : memref<1x8x1x128x64xf32, #tpu.memory_space<vmem>>, vector<1x1x1x128x64xf32>
    %22 = vector.shape_cast %21 : vector<1x1x1x128x64xf32> to vector<128x64xf32>
    %cst_41 = arith.constant dense<0.000000e+00> : vector<128x64xf32>
    %23 = tpu.matmul %20, %22, %cst_41 {dimension_numbers = #tpu.dot_dimension_numbers<[1], [0], [0], [1], [0, 0, 1, 1], [], []>} : vector<128x128xf32>, vector<128x64xf32>, vector<128x64xf32> -> vector<128x64xf32>
    %24 = tpu.concatenate %18, %23 in 1 : vector<128x64xf32>, vector<128x64xf32> -> vector<128x128xf32>
    %c0_42 = arith.constant 0 : index
    %c0_43 = arith.constant 0 : index
    %c128 = arith.constant 128 : index
    %25 = vector.load %arg4[%c0_42, %c0_43, %c128] : memref<1x128x512xf32, #tpu.memory_space<vmem>>, vector<1x128x128xf32>
    %26 = vector.shape_cast %25 : vector<1x128x128xf32> to vector<128x128xf32>
    %27 = vector.shape_cast %24 : vector<128x128xf32> to vector<1x128x128xf32>
    tpu.vector_store %arg4[%c0_42, %c0_43, %c128], %27 {strides = array<i32>} : memref<1x128x512xf32, #tpu.memory_space<vmem>>, vector<1x128x128xf32>,
    %c0_44 = arith.constant 0 : index
    %c4 = arith.constant 4 : index
    %c0_45 = arith.constant 0 : index
    %c0_46 = arith.constant 0 : index
    %c0_47 = arith.constant 0 : index
    %28 = vector.load %arg2[%c0_44, %c4, %c0_45, %c0_46, %c0_47] : memref<1x8x1x128x128xf32, #tpu.memory_space<vmem>>, vector<1x1x1x128x128xf32>
    %29 = vector.shape_cast %28 : vector<1x1x1x128x128xf32> to vector<128x128xf32>
    %c0_48 = arith.constant 0 : index
    %c4_49 = arith.constant 4 : index
    %c0_50 = arith.constant 0 : index
    %c0_51 = arith.constant 0 : index
    %c0_52 = arith.constant 0 : index
    %30 = vector.load %arg3[%c0_48, %c4_49, %c0_50, %c0_51, %c0_52] : memref<1x8x1x128x64xf32, #tpu.memory_space<vmem>>, vector<1x1x1x128x64xf32>
    %31 = vector.shape_cast %30 : vector<1x1x1x128x64xf32> to vector<128x64xf32>
    %cst_53 = arith.constant dense<0.000000e+00> : vector<128x64xf32>
    %32 = tpu.matmul %29, %31, %cst_53 {dimension_numbers = #tpu.dot_dimension_numbers<[1], [0], [0], [1], [0, 0, 1, 1], [], []>} : vector<128x128xf32>, vector<128x64xf32>, vector<128x64xf32> -> vector<128x64xf32>
    %c0_54 = arith.constant 0 : index
    %c5 = arith.constant 5 : index
    %c0_55 = arith.constant 0 : index
    %c0_56 = arith.constant 0 : index
    %c0_57 = arith.constant 0 : index
    %33 = vector.load %arg2[%c0_54, %c5, %c0_55, %c0_56, %c0_57] : memref<1x8x1x128x128xf32, #tpu.memory_space<vmem>>, vector<1x1x1x128x128xf32>
    %34 = vector.shape_cast %33 : vector<1x1x1x128x128xf32> to vector<128x128xf32>
    %c0_58 = arith.constant 0 : index
    %c5_59 = arith.constant 5 : index
    %c0_60 = arith.constant 0 : index
    %c0_61 = arith.constant 0 : index
    %c0_62 = arith.constant 0 : index
    %35 = vector.load %arg3[%c0_58, %c5_59, %c0_60, %c0_61, %c0_62] : memref<1x8x1x128x64xf32, #tpu.memory_space<vmem>>, vector<1x1x1x128x64xf32>
    %36 = vector.shape_cast %35 : vector<1x1x1x128x64xf32> to vector<128x64xf32>
    %cst_63 = arith.constant dense<0.000000e+00> : vector<128x64xf32>
    %37 = tpu.matmul %34, %36, %cst_63 {dimension_numbers = #tpu.dot_dimension_numbers<[1], [0], [0], [1], [0, 0, 1, 1], [], []>} : vector<128x128xf32>, vector<128x64xf32>, vector<128x64xf32> -> vector<128x64xf32>
    %38 = tpu.concatenate %32, %37 in 1 : vector<128x64xf32>, vector<128x64xf32> -> vector<128x128xf32>
    %c0_64 = arith.constant 0 : index
    %c0_65 = arith.constant 0 : index
    %c256 = arith.constant 256 : index
    %39 = vector.load %arg4[%c0_64, %c0_65, %c256] : memref<1x128x512xf32, #tpu.memory_space<vmem>>, vector<1x128x128xf32>
    %40 = vector.shape_cast %39 : vector<1x128x128xf32> to vector<128x128xf32>
    %41 = vector.shape_cast %38 : vector<128x128xf32> to vector<1x128x128xf32>
    tpu.vector_store %arg4[%c0_64, %c0_65, %c256], %41 {strides = array<i32>} : memref<1x128x512xf32, #tpu.memory_space<vmem>>, vector<1x128x128xf32>,
    %c0_66 = arith.constant 0 : index
    %c6 = arith.constant 6 : index
    %c0_67 = arith.constant 0 : index
    %c0_68 = arith.constant 0 : index
    %c0_69 = arith.constant 0 : index
    %42 = vector.load %arg2[%c0_66, %c6, %c0_67, %c0_68, %c0_69] : memref<1x8x1x128x128xf32, #tpu.memory_space<vmem>>, vector<1x1x1x128x128xf32>
    %43 = vector.shape_cast %42 : vector<1x1x1x128x128xf32> to vector<128x128xf32>
    %c0_70 = arith.constant 0 : index
    %c6_71 = arith.constant 6 : index
    %c0_72 = arith.constant 0 : index
    %c0_73 = arith.constant 0 : index
    %c0_74 = arith.constant 0 : index
    %44 = vector.load %arg3[%c0_70, %c6_71, %c0_72, %c0_73, %c0_74] : memref<1x8x1x128x64xf32, #tpu.memory_space<vmem>>, vector<1x1x1x128x64xf32>
    %45 = vector.shape_cast %44 : vector<1x1x1x128x64xf32> to vector<128x64xf32>
    %cst_75 = arith.constant dense<0.000000e+00> : vector<128x64xf32>
    %46 = tpu.matmul %43, %45, %cst_75 {dimension_numbers = #tpu.dot_dimension_numbers<[1], [0], [0], [1], [0, 0, 1, 1], [], []>} : vector<128x128xf32>, vector<128x64xf32>, vector<128x64xf32> -> vector<128x64xf32>
    %c0_76 = arith.constant 0 : index
    %c7 = arith.constant 7 : index
    %c0_77 = arith.constant 0 : index
    %c0_78 = arith.constant 0 : index
    %c0_79 = arith.constant 0 : index
    %47 = vector.load %arg2[%c0_76, %c7, %c0_77, %c0_78, %c0_79] : memref<1x8x1x128x128xf32, #tpu.memory_space<vmem>>, vector<1x1x1x128x128xf32>
    %48 = vector.shape_cast %47 : vector<1x1x1x128x128xf32> to vector<128x128xf32>
    %c0_80 = arith.constant 0 : index
    %c7_81 = arith.constant 7 : index
    %c0_82 = arith.constant 0 : index
    %c0_83 = arith.constant 0 : index
    %c0_84 = arith.constant 0 : index
    %49 = vector.load %arg3[%c0_80, %c7_81, %c0_82, %c0_83, %c0_84] : memref<1x8x1x128x64xf32, #tpu.memory_space<vmem>>, vector<1x1x1x128x64xf32>
    %50 = vector.shape_cast %49 : vector<1x1x1x128x64xf32> to vector<128x64xf32>
    %cst_85 = arith.constant dense<0.000000e+00> : vector<128x64xf32>
    %51 = tpu.matmul %48, %50, %cst_85 {dimension_numbers = #tpu.dot_dimension_numbers<[1], [0], [0], [1], [0, 0, 1, 1], [], []>} : vector<128x128xf32>, vector<128x64xf32>, vector<128x64xf32> -> vector<128x64xf32>
    %52 = tpu.concatenate %46, %51 in 1 : vector<128x64xf32>, vector<128x64xf32> -> vector<128x128xf32>
    %c0_86 = arith.constant 0 : index
    %c0_87 = arith.constant 0 : index
    %c384 = arith.constant 384 : index
    %53 = vector.load %arg4[%c0_86, %c0_87, %c384] : memref<1x128x512xf32, #tpu.memory_space<vmem>>, vector<1x128x128xf32>
    %54 = vector.shape_cast %53 : vector<1x128x128xf32> to vector<128x128xf32>
    %55 = vector.shape_cast %52 : vector<128x128xf32> to vector<1x128x128xf32>
    tpu.vector_store %arg4[%c0_86, %c0_87, %c384], %55 {strides = array<i32>} : memref<1x128x512xf32, #tpu.memory_space<vmem>>, vector<1x128x128xf32>,
    return
  }
  func.func @transform_0(%arg0: i32, %arg1: i32) -> (i32, i32, i32, i32, i32) {
    %c0_i32 = arith.constant 0 : i32
    %c0_i32_0 = arith.constant 0 : i32
    %c0_i32_1 = arith.constant 0 : i32
    %c0_i32_2 = arith.constant 0 : i32
    return %arg0, %c0_i32, %c0_i32_0, %arg1, %c0_i32_1 : i32, i32, i32, i32, i32
  }
  func.func @transform_1(%arg0: i32, %arg1: i32) -> (i32, i32, i32, i32, i32) {
    %c0_i32 = arith.constant 0 : i32
    %c0_i32_0 = arith.constant 0 : i32
    %c0_i32_1 = arith.constant 0 : i32
    %c0_i32_2 = arith.constant 0 : i32
    %c0_i32_3 = arith.constant 0 : i32
    return %arg0, %c0_i32, %c0_i32_0, %c0_i32_1, %c0_i32_2 : i32, i32, i32, i32, i32
  }
  func.func @transform_2(%arg0: i32, %arg1: i32) -> (i32, i32, i32) {
    %c0_i32 = arith.constant 0 : i32
    %c0_i32_0 = arith.constant 0 : i32
    return %arg0, %arg1, %c0_i32 : i32, i32, i32
  }
}

</mosaic_0001>

<llo_original>
// kernel: tpu_custom_call.1
$region0: #{tpu_custom_call.1}
  #allocation0 [shape = 'u32[]', space=smem, size = 0x4, offset = 0x4, fixed_abs, tag = 'smem constant byte address 0x4 - core index']
  #allocation1 [shape = 'u32[144,128]{1,0:T(1,128)}', space=vmem, size = 0x12000, scoped, tag = 'internal scratch']
  %s0 = inlined_call_operand.vmem [shape: f32[2,8,1,128,128], index: 0, kind: input, shape index: {}]
  %s1 = inlined_call_operand.vmem [shape: f32[2,8,1,128,64], index: 1, kind: input, shape index: {}]
  %s2 = inlined_call_operand.hbm [shape: f32[2,128,512], index: 2, kind: output, shape index: {}]
  %s3 = sld [smem:[#allocation0]]
  $region41: #{tpu_custom_call.1} parent=0
    _
  %s5 = ssub.s32 1, %s3
  %s6 = scalar_select 0, %s5, %s3
  $region1: #{tpu_custom_call.1} parent=0
    #allocation2 [shape = 'u8[524288]{0}', space=vmem, size = 0x80000, scoped, tag = 'output window, operand 0']
    #allocation3 [shape = 's32[2]{0}', space=sflag, size = 0x8, scoped, tag = 'scoped memory for tpu_custom_call.1']
    %7 = vsyncpa [#allocation3], 0
    %s8 = scalar_lea.sflag [#allocation3], 1
    %9 = vsyncpa %s8, 0
    loop: start=0, step=1, limit=4
    $region2: #{tpu_custom_call.1} parent=1 // loop_pre_header
      _
    $region3: #{tpu_custom_call.1} parent=1 // loop_header
      %s11 = sphi 0, %s15
      %p12 = scmp.ge.s32.totalorder %s11, 4
      %s18 = sphi 0, %s30
      %s19 = sphi 0, %s26
      %s20 = sphi 0, %s18
      %s21 = sphi 0, %s19
      %s22 = sphi 0, %s20
      %s23 = sphi 0, %s21
      %s35 = sphi 0, %s37
      %s38 = sphi 0, %s35
      %s39 = sphi 0, %s38
      %s55 = sphi 0, %s39
      %s61 = sphi 0, %s63
      %s64 = sphi 0, %s61
      %s65 = sphi 0, %s64
      %s81 = sphi 0, %s65
      %s89 = sphi 0, %s91
      %s92 = sphi 0, %s89
      %s93 = sphi 0, %s92
      %s109 = sphi 0, %s93
    $region4: #{tpu_custom_call.1} parent=1 // loop_header_branch
      %14 = sbr.rel (%p12) target = $region8
    $region5: #{tpu_custom_call.1} parent=1 // loop_body
      %s16 = ssub.s32 %s11, 1
      %s17 = ssub.s32 %s11, 2
      %s24 = sadd.s32 1, %s19
      %p25 = scmp.ge.s32.totalorder %s24, 1
      %s26 = scalar_select %p25, 0, %s24
      %s27 = sadd.s32 1, %s18
      %s28 = scalar_select %p25, %s27, %s18
      %p29 = scmp.ge.s32.totalorder %s28, 2
      %s30 = scalar_select %p29, 0, %s28
      %s31 = ssub.s32 %s18, %s30
      %s32 = ssub.s32 %s19, %s26
      %s33 = sor.u32 %s31, %s32
      %p34 = scmp.eq.s32.totalorder %s33, 0
      %s36 = sadd.s32 %s35, 1
      %s37 = scalar_select %p34, %s35, %s36
      %p40 = pneg %p34
      %p41 = scmp.eq.s32.totalorder %s11, 1
      %p42 = por %p40, %p41
      %p43 = scmp.ne.s32.totalorder %s35, %s38
      %p44 = scmp.eq.s32.totalorder %s11, 0
      %p45 = por %p43, %p44
      %p46 = scmp.ne.s32.totalorder %s35, %s38
      %p47 = scmp.eq.s32.totalorder %s16, 1
      %p48 = por %p46, %p47
      %p49 = scmp.ne.s32.totalorder %s38, %s39
      %p50 = scmp.eq.s32.totalorder %s16, 0
      %p51 = por %p49, %p50
      %p52 = scmp.ne.s32.totalorder %s38, %s39
      %p53 = scmp.eq.s32.totalorder %s17, 1
      %p54 = por %p52, %p53
      %p56 = scmp.ne.s32.totalorder %s39, %s55
      %p57 = scmp.eq.s32.totalorder %s17, 0
      %p58 = por %p56, %p57
      %s59 = ssub.s32 %s18, %s30
      %p60 = scmp.eq.s32.totalorder %s59, 0
      %s62 = sadd.s32 %s61, 1
      %s63 = scalar_select %p60, %s61, %s62
      %p66 = pneg %p60
      %p67 = scmp.eq.s32.totalorder %s11, 1
      %p68 = por %p66, %p67
      %p69 = scmp.ne.s32.totalorder %s61, %s64
      %p70 = scmp.eq.s32.totalorder %s11, 0
      %p71 = por %p69, %p70
      %p72 = scmp.ne.s32.totalorder %s61, %s64
      %p73 = scmp.eq.s32.totalorder %s16, 1
      %p74 = por %p72, %p73
      %p75 = scmp.ne.s32.totalorder %s64, %s65
      %p76 = scmp.eq.s32.totalorder %s16, 0
      %p77 = por %p75, %p76
      %p78 = scmp.ne.s32.totalorder %s64, %s65
      %p79 = scmp.eq.s32.totalorder %s17, 1
      %p80 = por %p78, %p79
      %p82 = scmp.ne.s32.totalorder %s65, %s81
      %p83 = scmp.eq.s32.totalorder %s17, 0
      %p84 = por %p82, %p83
      %s85 = ssub.s32 %s18, %s30
      %s86 = ssub.s32 %s19, %s26
      %s87 = sor.u32 %s85, %s86
      %p88 = scmp.eq.s32.totalorder %s87, 0
      %s90 = sadd.s32 %s89, 1
      %s91 = scalar_select %p88, %s89, %s90
      %p94 = pneg %p88
      %p95 = scmp.eq.s32.totalorder %s11, 1
      %p96 = por %p94, %p95
      %p97 = scmp.ne.s32.totalorder %s89, %s92
      %p98 = scmp.eq.s32.totalorder %s11, 0
      %p99 = por %p97, %p98
      %p100 = scmp.ne.s32.totalorder %s89, %s92
      %p101 = scmp.eq.s32.totalorder %s16, 1
      %p102 = por %p100, %p101
      %p103 = scmp.ne.s32.totalorder %s92, %s93
      %p104 = scmp.eq.s32.totalorder %s16, 0
      %p105 = por %p103, %p104
      %p106 = scmp.ne.s32.totalorder %s92, %s93
      %p107 = scmp.eq.s32.totalorder %s17, 1
      %p108 = por %p106, %p107
      %p110 = scmp.ne.s32.totalorder %s93, %s109
      %p111 = scmp.eq.s32.totalorder %s17, 0
      %p112 = por %p110, %p111
      %p113 = scmp.le.s32.totalorder 1, %s11
      %p114 = scmp.lt.s32.totalorder %s11, 3
      %p115 = pnand %p113, %p114
      %p116 = pneg %p115
      // Predicated region
      $region9: #{tpu_custom_call.1} parent=5 // pred_check
        _
      $region10: #{tpu_custom_call.1} parent=5 // pred_check_branch
        %118 = sbr.rel (%p115) target = $region12
      $region11: #{tpu_custom_call.1} parent=5 // pred_region
        %s119 = ssub.s32 %s11, 1
      $region12: #{tpu_custom_call.1} parent=5 // pred_fallthru
        _
      %p120 = scmp.lt.s32.totalorder %s11, 2
      // Predicated region
      $region13: #{tpu_custom_call.1} parent=5 // pred_check
        %p121 = pneg %p120
      $region14: #{tpu_custom_call.1} parent=5 // pred_check_branch
        %123 = sbr.rel (%p121) target = $region16
      $region15: #{tpu_custom_call.1} parent=5 // pred_region
        // Predicated region
        $region17: #{tpu_custom_call.1} parent=15 // pred_check
          %p124 = pneg %p45
        $region18: #{tpu_custom_call.1} parent=15 // pred_check_branch
          %126 = sbr.rel (%p124) target = $region20
        $region19: #{tpu_custom_call.1} parent=15 // pred_region
          %s127 = smul.u32 16, %s19
          %p128 = scmp.lt.s32.totalorder %s18, 1
          %s129 = scalar_select %p128, %s18, 1
          %p130 = scmp.lt.s32.totalorder %s127, 15
          %s131 = scalar_select %p130, %s127, 15
          %s132 = smul.addr %s129, 128
          %s133 = sadd.s32 %s131, %s132
          %s134 = smul.addr %s133, 8
          %s135 = scalar_lea.vmem %s0, %s134
          %s136 = smul.u32 16, %s19
        $region20: #{tpu_custom_call.1} parent=15 // pred_fallthru
          _
        // Predicated region
        $region21: #{tpu_custom_call.1} parent=15 // pred_check
          %p137 = pneg %p71
        $region22: #{tpu_custom_call.1} parent=15 // pred_check_branch
          %139 = sbr.rel (%p137) target = $region24
        $region23: #{tpu_custom_call.1} parent=15 // pred_region
          %p140 = scmp.lt.s32.totalorder %s18, 1
          %s141 = scalar_select %p140, %s18, 1
          %s142 = smul.addr %s141, 128
          %s143 = smul.addr %s142, 8
          %s144 = scalar_lea.vmem %s1, %s143
        $region24: #{tpu_custom_call.1} parent=15 // pred_fallthru
          _
      $region16: #{tpu_custom_call.1} parent=5 // pred_fallthru
        _
      %p145 = scmp.le.s32.totalorder 1, %s11
      %p146 = scmp.lt.s32.totalorder %s11, 3
      %p147 = pnand %p145, %p146
      %p148 = pneg %p147
      // Predicated region
      $region25: #{tpu_custom_call.1} parent=5 // pred_check
        _
      $region26: #{tpu_custom_call.1} parent=5 // pred_check_branch
        %150 = sbr.rel (%p147) target = $region28
      $region27: #{tpu_custom_call.1} parent=5 // pred_region
        %s151 = ssub.s32 %s11, 1
        %s152 = smul.u32 16, %s21
        %p153 = scmp.lt.s32.totalorder %s20, 1
        %s154 = scalar_select %p153, %s20, 1
        %p155 = scmp.lt.s32.totalorder %s152, 15
        %s156 = scalar_select %p155, %s152, 15
        %s157 = smul.addr %s154, 128
        %s158 = sadd.s32 %s156, %s157
        %s159 = smul.addr %s158, 8
        %s160 = scalar_lea.vmem %s0, %s159
        %p161 = pneg %p51
        %p162 = pneg %p48
        %p163 = scmp.lt.s32.totalorder %s20, 1
        %s164 = scalar_select %p163, %s20, 1
        %s165 = smul.addr %s164, 128
        %s166 = smul.addr %s165, 8
        %s167 = scalar_lea.vmem %s1, %s166
        %p168 = pneg %p77
        %p169 = pneg %p74
        %p170 = pneg %p105
        %p171 = pneg %p102
        %s172 = sand.u32 %s92, 1
        %s173 = scalar_lea.sflag [#allocation3], %s172
        %s174 = sand.u32 %s92, 1
        %s175 = smul.addr %s174, 512
        %s176 = scalar_lea.vmem [#allocation2], %s175
        %s177 = smul.u32 16, %s21
        %p178 = scmp.lt.s32.totalorder %s20, 1
        %s179 = scalar_select %p178, %s20, 1
        %p180 = scmp.lt.s32.totalorder %s177, 15
        %s181 = scalar_select %p180, %s177, 15
        %s182 = smul.addr %s179, 128
        %s183 = sadd.s32 %s181, %s182
        %s184 = smul.addr %s183, 8
        %s185 = scalar_lea.vmem %s0, %s184
        %s186 = smul.u32 16, %s21
        %p187 = scmp.lt.s32.totalorder %s20, 1
        %s188 = scalar_select %p187, %s20, 1
        %s189 = smul.addr %s188, 128
        %s190 = smul.addr %s189, 8
        %s191 = scalar_lea.vmem %s1, %s190
        %s192 = smul.u32 16, %s21
        %v193 = vld [vmem:[%s185] sm:$0xff]
        %v194 = vld [vmem:[%s185 + $0x8] sm:$0xff]
        %v195 = vld [vmem:[%s185 + $0x10] sm:$0xff]
        %v196 = vld [vmem:[%s185 + $0x18] sm:$0xff]
        %v197 = vld [vmem:[%s185 + $0x20] sm:$0xff]
        %v198 = vld [vmem:[%s185 + $0x28] sm:$0xff]
        %v199 = vld [vmem:[%s185 + $0x30] sm:$0xff]
        %v200 = vld [vmem:[%s185 + $0x38] sm:$0xff]
        %v201 = vld [vmem:[%s185 + $0x40] sm:$0xff]
        %v202 = vld [vmem:[%s185 + $0x48] sm:$0xff]
        %v203 = vld [vmem:[%s185 + $0x50] sm:$0xff]
        %v204 = vld [vmem:[%s185 + $0x58] sm:$0xff]
        %v205 = vld [vmem:[%s185 + $0x60] sm:$0xff]
        %v206 = vld [vmem:[%s185 + $0x68] sm:$0xff]
        %v207 = vld [vmem:[%s185 + $0x70] sm:$0xff]
        %v208 = vld [vmem:[%s185 + $0x78] sm:$0xff]
        %v209 = vld [vmem:[%s191] sm:$0xff]
        %v210 = vld [vmem:[%s191 + $0x8] sm:$0xff]
        %v211 = vld [vmem:[%s191 + $0x10] sm:$0xff]
        %v212 = vld [vmem:[%s191 + $0x18] sm:$0xff]
        %v213 = vld [vmem:[%s191 + $0x20] sm:$0xff]
        %v214 = vld [vmem:[%s191 + $0x28] sm:$0xff]
        %v215 = vld [vmem:[%s191 + $0x30] sm:$0xff]
        %v216 = vld [vmem:[%s191 + $0x38] sm:$0xff]
        %v217 = vld [vmem:[%s191 + $0x40] sm:$0xff]
        %v218 = vld [vmem:[%s191 + $0x48] sm:$0xff]
        %v219 = vld [vmem:[%s191 + $0x50] sm:$0xff]
        %v220 = vld [vmem:[%s191 + $0x58] sm:$0xff]
        %v221 = vld [vmem:[%s191 + $0x60] sm:$0xff]
        %v222 = vld [vmem:[%s191 + $0x68] sm:$0xff]
        %v223 = vld [vmem:[%s191 + $0x70] sm:$0xff]
        %v224 = vld [vmem:[%s191 + $0x78] sm:$0xff]
        %225 = vmatprep.subr.mxu0 0.0
        %226 = vmatpush1.msra.mxu0 %v209
        %227 = vmatprep.subr.mxu0 0.0
        %228 = vmatpush1.msra.mxu0 %v210
        %229 = vmatprep.subr.mxu0 0.0
        %230 = vmatpush1.msra.mxu0 %v211
        %231 = vmatprep.subr.mxu0 0.0
        %232 = vmatpush1.msra.mxu0 %v212
        %233 = vmatprep.subr.mxu0 0.0
        %234 = vmatpush1.msra.mxu0 %v213
        %235 = vmatprep.subr.mxu0 0.0
        %236 = vmatpush1.msra.mxu0 %v214
        %237 = vmatprep.subr.mxu0 0.0
        %238 = vmatpush1.msra.mxu0 %v215
        %239 = vmatprep.subr.mxu0 0.0
        %240 = vmatpush1.msra.mxu0 %v216
        %241 = vmatprep.subr.mxu0 0.0
        %242 = vmatpush1.msra.mxu0 %v217
        %243 = vmatprep.subr.mxu0 0.0
        %244 = vmatpush1.msra.mxu0 %v218
        %245 = vmatprep.subr.mxu0 0.0
        %246 = vmatpush1.msra.mxu0 %v219
        %247 = vmatprep.subr.mxu0 0.0
        %248 = vmatpush1.msra.mxu0 %v220
        %249 = vmatprep.subr.mxu0 0.0
        %250 = vmatpush1.msra.mxu0 %v221
        %251 = vmatprep.subr.mxu0 0.0
        %252 = vmatpush1.msra.mxu0 %v222
        %253 = vmatprep.subr.mxu0 0.0
        %254 = vmatpush1.msra.mxu0 %v223
        %255 = vmatprep.subr.mxu0 0.0
        %256 = vmatpush1.msra.mxu0 %v224
        %257 = vmatprep.subr.mxu0 0.0
        %258 = vmatpush1.msra.mxu0 0.0
        %259 = vmatprep.subr.mxu0 0.0
        %260 = vmatpush1.msra.mxu0 0.0
        %261 = vmatprep.subr.mxu0 0.0
        %262 = vmatpush1.msra.mxu0 0.0
        %263 = vmatprep.subr.mxu0 0.0
        %264 = vmatpush1.msra.mxu0 0.0
        %265 = vmatprep.subr.mxu0 0.0
        %266 = vmatpush1.msra.mxu0 0.0
        %267 = vmatprep.subr.mxu0 0.0
        %268 = vmatpush1.msra.mxu0 0.0
        %269 = vmatprep.subr.mxu0 0.0
        %270 = vmatpush1.msra.mxu0 0.0
        %271 = vmatprep.subr.mxu0 0.0
        %272 = vmatpush1.msra.mxu0 0.0
        %273 = vmatprep.subr.mxu0 0.0
        %274 = vmatpush1.msra.mxu0 0.0
        %275 = vmatprep.subr.mxu0 0.0
        %276 = vmatpush1.msra.mxu0 0.0
        %277 = vmatprep.subr.mxu0 0.0
        %278 = vmatpush1.msra.mxu0 0.0
        %279 = vmatprep.subr.mxu0 0.0
        %280 = vmatpush1.msra.mxu0 0.0
        %281 = vmatprep.subr.mxu0 0.0
        %282 = vmatpush1.msra.mxu0 0.0
        %283 = vmatprep.subr.mxu0 0.0
        %284 = vmatpush1.msra.mxu0 0.0
        %285 = vmatprep.subr.mxu0 0.0
        %286 = vmatpush1.msra.mxu0 0.0
        %287 = vmatprep.subr.mxu0 0.0
        %288 = vmatpush1.msra.mxu0 0.0
        %289 = vmatprep.mubr.f32.mxu0 0.0
        %290 = vmatmul.mubr.f32.gmra.mrb[0].mxu0 %v193
        %v291 = vpop.f32.mrb[0].mxu0
        %v292 = vadd.f32 0.0, %v291
        %v293 = vpop.f32.mrb[0].mxu0
        %294 = vmatprep.mubr.f32.mxu0 0.0
        %295 = vmatmul.mubr.f32.gmra.mrb[0].mxu0 %v194
        %v296 = vpop.f32.mrb[0].mxu0
        %v297 = vadd.f32 0.0, %v296
        %v298 = vpop.f32.mrb[0].mxu0
        %299 = vmatprep.mubr.f32.mxu0 0.0
        %300 = vmatmul.mubr.f32.gmra.mrb[0].mxu0 %v195
        %v301 = vpop.f32.mrb[0].mxu0
        %v302 = vadd.f32 0.0, %v301
        %v303 = vpop.f32.mrb[0].mxu0
        %304 = vmatprep.mubr.f32.mxu0 0.0
        %305 = vmatmul.mubr.f32.gmra.mrb[0].mxu0 %v196
        %v306 = vpop.f32.mrb[0].mxu0
        %v307 = vadd.f32 0.0, %v306
        %v308 = vpop.f32.mrb[0].mxu0
        %309 = vmatprep.mubr.f32.mxu0 0.0
        %310 = vmatmul.mubr.f32.gmra.mrb[0].mxu0 %v197
        %v311 = vpop.f32.mrb[0].mxu0
        %v312 = vadd.f32 0.0, %v311
        %v313 = vpop.f32.mrb[0].mxu0
        %314 = vmatprep.mubr.f32.mxu0 0.0
        %315 = vmatmul.mubr.f32.gmra.mrb[0].mxu0 %v198
        %v316 = vpop.f32.mrb[0].mxu0
        %v317 = vadd.f32 0.0, %v316
        %v318 = vpop.f32.mrb[0].mxu0
        %319 = vmatprep.mubr.f32.mxu0 0.0
        %320 = vmatmul.mubr.f32.gmra.mrb[0].mxu0 %v199
        %v321 = vpop.f32.mrb[0].mxu0
        %v322 = vadd.f32 0.0, %v321
        %v323 = vpop.f32.mrb[0].mxu0
        %324 = vmatprep.mubr.f32.mxu0 0.0
        %325 = vmatmul.mubr.f32.gmra.mrb[0].mxu0 %v200
        %v326 = vpop.f32.mrb[0].mxu0
        %v327 = vadd.f32 0.0, %v326
        %v328 = vpop.f32.mrb[0].mxu0
        %329 = vmatprep.mubr.f32.mxu0 0.0
        %330 = vmatmul.mubr.f32.gmra.mrb[0].mxu0 %v201
        %v331 = vpop.f32.mrb[0].mxu0
        %v332 = vadd.f32 0.0, %v331
        %v333 = vpop.f32.mrb[0].mxu0
        %334 = vmatprep.mubr.f32.mxu0 0.0
        %335 = vmatmul.mubr.f32.gmra.mrb[0].mxu0 %v202
        %v336 = vpop.f32.mrb[0].mxu0
        %v337 = vadd.f32 0.0, %v336
        %v338 = vpop.f32.mrb[0].mxu0
        %339 = vmatprep.mubr.f32.mxu0 0.0
        %340 = vmatmul.mubr.f32.gmra.mrb[0].mxu0 %v203
        %v341 = vpop.f32.mrb[0].mxu0
        %v342 = vadd.f32 0.0, %v341
        %v343 = vpop.f32.mrb[0].mxu0
        %344 = vmatprep.mubr.f32.mxu0 0.0
        %345 = vmatmul.mubr.f32.gmra.mrb[0].mxu0 %v204
        %v346 = vpop.f32.mrb[0].mxu0
        %v347 = vadd.f32 0.0, %v346
        %v348 = vpop.f32.mrb[0].mxu0
        %349 = vmatprep.mubr.f32.mxu0 0.0
        %350 = vmatmul.mubr.f32.gmra.mrb[0].mxu0 %v205
        %v351 = vpop.f32.mrb[0].mxu0
        %v352 = vadd.f32 0.0, %v351
        %v353 = vpop.f32.mrb[0].mxu0
        %354 = vmatprep.mubr.f32.mxu0 0.0
        %355 = vmatmul.mubr.f32.gmra.mrb[0].mxu0 %v206
        %v356 = vpop.f32.mrb[0].mxu0
        %v357 = vadd.f32 0.0, %v356
        %v358 = vpop.f32.mrb[0].mxu0
        %359 = vmatprep.mubr.f32.mxu0 0.0
        %360 = vmatmul.mubr.f32.gmra.mrb[0].mxu0 %v207
        %v361 = vpop.f32.mrb[0].mxu0
        %v362 = vadd.f32 0.0, %v361
        %v363 = vpop.f32.mrb[0].mxu0
        %364 = vmatprep.mubr.f32.mxu0 0.0
        %365 = vmatmul.mubr.f32.gmra.mrb[0].mxu0 %v208
        %v366 = vpop.f32.mrb[0].mxu0
        %v367 = vadd.f32 0.0, %v366
        %v368 = vpop.f32.mrb[0].mxu0
        %369 = vdwg.mxu0
        %s370 = scalar_lea.vmem %s185, 128
        %v371 = vld [vmem:[%s370] sm:$0xff]
        %v372 = vld [vmem:[%s370 + $0x8] sm:$0xff]
        %v373 = vld [vmem:[%s370 + $0x10] sm:$0xff]
        %v374 = vld [vmem:[%s370 + $0x18] sm:$0xff]
        %v375 = vld [vmem:[%s370 + $0x20] sm:$0xff]
        %v376 = vld [vmem:[%s370 + $0x28] sm:$0xff]
        %v377 = vld [vmem:[%s370 + $0x30] sm:$0xff]
        %v378 = vld [vmem:[%s370 + $0x38] sm:$0xff]
        %v379 = vld [vmem:[%s370 + $0x40] sm:$0xff]
        %v380 = vld [vmem:[%s370 + $0x48] sm:$0xff]
        %v381 = vld [vmem:[%s370 + $0x50] sm:$0xff]
        %v382 = vld [vmem:[%s370 + $0x58] sm:$0xff]
        %v383 = vld [vmem:[%s370 + $0x60] sm:$0xff]
        %v384 = vld [vmem:[%s370 + $0x68] sm:$0xff]
        %v385 = vld [vmem:[%s370 + $0x70] sm:$0xff]
        %v386 = vld [vmem:[%s370 + $0x78] sm:$0xff]
        %s387 = scalar_lea.vmem %s191, 128
        %v388 = vld [vmem:[%s387] sm:$0xff]
        %v389 = vld [vmem:[%s387 + $0x8] sm:$0xff]
        %v390 = vld [vmem:[%s387 + $0x10] sm:$0xff]
        %v391 = vld [vmem:[%s387 + $0x18] sm:$0xff]
        %v392 = vld [vmem:[%s387 + $0x20] sm:$0xff]
        %v393 = vld [vmem:[%s387 + $0x28] sm:$0xff]
        %v394 = vld [vmem:[%s387 + $0x30] sm:$0xff]
        %v395 = vld [vmem:[%s387 + $0x38] sm:$0xff]
        %v396 = vld [vmem:[%s387 + $0x40] sm:$0xff]
        %v397 = vld [vmem:[%s387 + $0x48] sm:$0xff]
        %v398 = vld [vmem:[%s387 + $0x50] sm:$0xff]
        %v399 = vld [vmem:[%s387 + $0x58] sm:$0xff]
        %v400 = vld [vmem:[%s387 + $0x60] sm:$0xff]
        %v401 = vld [vmem:[%s387 + $0x68] sm:$0xff]
        %v402 = vld [vmem:[%s387 + $0x70] sm:$0xff]
        %v403 = vld [vmem:[%s387 + $0x78] sm:$0xff]
        %404 = vmatprep.subr.mxu0 0.0
        %405 = vmatpush1.msra.mxu0 %v388
        %406 = vmatprep.subr.mxu0 0.0
        %407 = vmatpush1.msra.mxu0 %v389
        %408 = vmatprep.subr.mxu0 0.0
        %409 = vmatpush1.msra.mxu0 %v390
        %410 = vmatprep.subr.mxu0 0.0
        %411 = vmatpush1.msra.mxu0 %v391
        %412 = vmatprep.subr.mxu0 0.0
        %413 = vmatpush1.msra.mxu0 %v392
        %414 = vmatprep.subr.mxu0 0.0
        %415 = vmatpush1.msra.mxu0 %v393
        %416 = vmatprep.subr.mxu0 0.0
        %417 = vmatpush1.msra.mxu0 %v394
        %418 = vmatprep.subr.mxu0 0.0
        %419 = vmatpush1.msra.mxu0 %v395
        %420 = vmatprep.subr.mxu0 0.0
        %421 = vmatpush1.msra.mxu0 %v396
        %422 = vmatprep.subr.mxu0 0.0
        %423 = vmatpush1.msra.mxu0 %v397
        %424 = vmatprep.subr.mxu0 0.0
        %425 = vmatpush1.msra.mxu0 %v398
        %426 = vmatprep.subr.mxu0 0.0
        %427 = vmatpush1.msra.mxu0 %v399
        %428 = vmatprep.subr.mxu0 0.0
        %429 = vmatpush1.msra.mxu0 %v400
        %430 = vmatprep.subr.mxu0 0.0
        %431 = vmatpush1.msra.mxu0 %v401
        %432 = vmatprep.subr.mxu0 0.0
        %433 = vmatpush1.msra.mxu0 %v402
        %434 = vmatprep.subr.mxu0 0.0
        %435 = vmatpush1.msra.mxu0 %v403
        %436 = vmatprep.subr.mxu0 0.0
        %437 = vmatpush1.msra.mxu0 0.0
        %438 = vmatprep.subr.mxu0 0.0
        %439 = vmatpush1.msra.mxu0 0.0
        %440 = vmatprep.subr.mxu0 0.0
        %441 = vmatpush1.msra.mxu0 0.0
        %442 = vmatprep.subr.mxu0 0.0
        %443 = vmatpush1.msra.mxu0 0.0
        %444 = vmatprep.subr.mxu0 0.0
        %445 = vmatpush1.msra.mxu0 0.0
        %446 = vmatprep.subr.mxu0 0.0
        %447 = vmatpush1.msra.mxu0 0.0
        %448 = vmatprep.subr.mxu0 0.0
        %449 = vmatpush1.msra.mxu0 0.0
        %450 = vmatprep.subr.mxu0 0.0
        %451 = vmatpush1.msra.mxu0 0.0
        %452 = vmatprep.subr.mxu0 0.0
        %453 = vmatpush1.msra.mxu0 0.0
        %454 = vmatprep.subr.mxu0 0.0
        %455 = vmatpush1.msra.mxu0 0.0
        %456 = vmatprep.subr.mxu0 0.0
        %457 = vmatpush1.msra.mxu0 0.0
        %458 = vmatprep.subr.mxu0 0.0
        %459 = vmatpush1.msra.mxu0 0.0
        %460 = vmatprep.subr.mxu0 0.0
        %461 = vmatpush1.msra.mxu0 0.0
        %462 = vmatprep.subr.mxu0 0.0
        %463 = vmatpush1.msra.mxu0 0.0
        %464 = vmatprep.subr.mxu0 0.0
        %465 = vmatpush1.msra.mxu0 0.0
        %466 = vmatprep.subr.mxu0 0.0
        %467 = vmatpush1.msra.mxu0 0.0
        %468 = vmatprep.mubr.f32.mxu0 0.0
        %469 = vmatmul.mubr.f32.gmra.mrb[0].mxu0 %v371
        %v470 = vpop.f32.mrb[0].mxu0
        %v471 = vadd.f32 0.0, %v470
        %v472 = vpop.f32.mrb[0].mxu0
        %473 = vmatprep.mubr.f32.mxu0 0.0
        %474 = vmatmul.mubr.f32.gmra.mrb[0].mxu0 %v372
        %v475 = vpop.f32.mrb[0].mxu0
        %v476 = vadd.f32 0.0, %v475
        %v477 = vpop.f32.mrb[0].mxu0
        %478 = vmatprep.mubr.f32.mxu0 0.0
        %479 = vmatmul.mubr.f32.gmra.mrb[0].mxu0 %v373
        %v480 = vpop.f32.mrb[0].mxu0
        %v481 = vadd.f32 0.0, %v480
        %v482 = vpop.f32.mrb[0].mxu0
        %483 = vmatprep.mubr.f32.mxu0 0.0
        %484 = vmatmul.mubr.f32.gmra.mrb[0].mxu0 %v374
        %v485 = vpop.f32.mrb[0].mxu0
        %v486 = vadd.f32 0.0, %v485
        %v487 = vpop.f32.mrb[0].mxu0
        %488 = vmatprep.mubr.f32.mxu0 0.0
        %489 = vmatmul.mubr.f32.gmra.mrb[0].mxu0 %v375
        %v490 = vpop.f32.mrb[0].mxu0
        %v491 = vadd.f32 0.0, %v490
        %v492 = vpop.f32.mrb[0].mxu0
        %493 = vmatprep.mubr.f32.mxu0 0.0
        %494 = vmatmul.mubr.f32.gmra.mrb[0].mxu0 %v376
        %v495 = vpop.f32.mrb[0].mxu0
        %v496 = vadd.f32 0.0, %v495
        %v497 = vpop.f32.mrb[0].mxu0
        %498 = vmatprep.mubr.f32.mxu0 0.0
        %499 = vmatmul.mubr.f32.gmra.mrb[0].mxu0 %v377
        %v500 = vpop.f32.mrb[0].mxu0
        %v501 = vadd.f32 0.0, %v500
        %v502 = vpop.f32.mrb[0].mxu0
        %503 = vmatprep.mubr.f32.mxu0 0.0
        %504 = vmatmul.mubr.f32.gmra.mrb[0].mxu0 %v378
        %v505 = vpop.f32.mrb[0].mxu0
        %v506 = vadd.f32 0.0, %v505
        %v507 = vpop.f32.mrb[0].mxu0
        %508 = vmatprep.mubr.f32.mxu0 0.0
        %509 = vmatmul.mubr.f32.gmra.mrb[0].mxu0 %v379
        %v510 = vpop.f32.mrb[0].mxu0
        %v511 = vadd.f32 0.0, %v510
        %v512 = vpop.f32.mrb[0].mxu0
        %513 = vmatprep.mubr.f32.mxu0 0.0
        %514 = vmatmul.mubr.f32.gmra.mrb[0].mxu0 %v380
        %v515 = vpop.f32.mrb[0].mxu0
        %v516 = vadd.f32 0.0, %v515
        %v517 = vpop.f32.mrb[0].mxu0
        %518 = vmatprep.mubr.f32.mxu0 0.0
        %519 = vmatmul.mubr.f32.gmra.mrb[0].mxu0 %v381
        %v520 = vpop.f32.mrb[0].mxu0
        %v521 = vadd.f32 0.0, %v520
        %v522 = vpop.f32.mrb[0].mxu0
        %523 = vmatprep.mubr.f32.mxu0 0.0
        %524 = vmatmul.mubr.f32.gmra.mrb[0].mxu0 %v382
        %v525 = vpop.f32.mrb[0].mxu0
        %v526 = vadd.f32 0.0, %v525
        %v527 = vpop.f32.mrb[0].mxu0
        %528 = vmatprep.mubr.f32.mxu0 0.0
        %529 = vmatmul.mubr.f32.gmra.mrb[0].mxu0 %v383
        %v530 = vpop.f32.mrb[0].mxu0
        %v531 = vadd.f32 0.0, %v530
        %v532 = vpop.f32.mrb[0].mxu0
        %533 = vmatprep.mubr.f32.mxu0 0.0
        %534 = vmatmul.mubr.f32.gmra.mrb[0].mxu0 %v384
        %v535 = vpop.f32.mrb[0].mxu0
        %v536 = vadd.f32 0.0, %v535
        %v537 = vpop.f32.mrb[0].mxu0
        %538 = vmatprep.mubr.f32.mxu0 0.0
        %539 = vmatmul.mubr.f32.gmra.mrb[0].mxu0 %v385
        %v540 = vpop.f32.mrb[0].mxu0
        %v541 = vadd.f32 0.0, %v540
        %v542 = vpop.f32.mrb[0].mxu0
        %543 = vmatprep.mubr.f32.mxu0 0.0
        %544 = vmatmul.mubr.f32.gmra.mrb[0].mxu0 %v386
        %v545 = vpop.f32.mrb[0].mxu0
        %v546 = vadd.f32 0.0, %v545
        %v547 = vpop.f32.mrb[0].mxu0
        %548 = vdwg.mxu0
        %565 = vrot.lane.b32.xlu0 %v471, 64
        %v566 = vpop.permute.xlu0 %565
        %567 = vrot.lane.b32.xlu0 %v476, 64
        %v568 = vpop.permute.xlu0 %567
        %569 = vrot.lane.b32.xlu0 %v481, 64
        %v570 = vpop.permute.xlu0 %569
        %571 = vrot.lane.b32.xlu0 %v486, 64
        %v572 = vpop.permute.xlu0 %571
        %573 = vrot.lane.b32.xlu0 %v491, 64
        %v574 = vpop.permute.xlu0 %573
        %575 = vrot.lane.b32.xlu0 %v496, 64
        %v576 = vpop.permute.xlu0 %575
        %577 = vrot.lane.b32.xlu0 %v501, 64
        %v578 = vpop.permute.xlu0 %577
        %579 = vrot.lane.b32.xlu0 %v506, 64
        %v580 = vpop.permute.xlu0 %579
        %581 = vrot.lane.b32.xlu0 %v511, 64
        %v582 = vpop.permute.xlu0 %581
        %583 = vrot.lane.b32.xlu0 %v516, 64
        %v584 = vpop.permute.xlu0 %583
        %585 = vrot.lane.b32.xlu0 %v521, 64
        %v586 = vpop.permute.xlu0 %585
        %587 = vrot.lane.b32.xlu0 %v526, 64
        %v588 = vpop.permute.xlu0 %587
        %589 = vrot.lane.b32.xlu0 %v531, 64
        %v590 = vpop.permute.xlu0 %589
        %591 = vrot.lane.b32.xlu0 %v536, 64
        %v592 = vpop.permute.xlu0 %591
        %593 = vrot.lane.b32.xlu0 %v541, 64
        %v594 = vpop.permute.xlu0 %593
        %595 = vrot.lane.b32.xlu0 %v546, 64
        %v596 = vpop.permute.xlu0 %595
        %vm613 = vcmask 523264
        %v614 = vsel %vm613, %v292, %v566
        %v615 = vsel %vm613, %v297, %v568
        %v616 = vsel %vm613, %v302, %v570
        %v617 = vsel %vm613, %v307, %v572
        %v618 = vsel %vm613, %v312, %v574
        %v619 = vsel %vm613, %v317, %v576
        %v620 = vsel %vm613, %v322, %v578
        %v621 = vsel %vm613, %v327, %v580
        %v622 = vsel %vm613, %v332, %v582
        %v623 = vsel %vm613, %v337, %v584
        %v624 = vsel %vm613, %v342, %v586
        %v625 = vsel %vm613, %v347, %v588
        %v626 = vsel %vm613, %v352, %v590
        %v627 = vsel %vm613, %v357, %v592
        %v628 = vsel %vm613, %v362, %v594
        %v629 = vsel %vm613, %v367, %v596
        %630 = vst [vmem:[%s176] sm:$0xff] %v614
        %631 = vst [vmem:[%s176 + $0x20] sm:$0xff] %v615
        %632 = vst [vmem:[%s176 + $0x40] sm:$0xff] %v616
        %633 = vst [vmem:[%s176 + $0x60] sm:$0xff] %v617
        %634 = vst [vmem:[%s176 + $0x80] sm:$0xff] %v618
        %635 = vst [vmem:[%s176 + $0xa0] sm:$0xff] %v619
        %636 = vst [vmem:[%s176 + $0xc0] sm:$0xff] %v620
        %637 = vst [vmem:[%s176 + $0xe0] sm:$0xff] %v621
        %638 = vst [vmem:[%s176 + $0x100] sm:$0xff] %v622
        %639 = vst [vmem:[%s176 + $0x120] sm:$0xff] %v623
        %640 = vst [vmem:[%s176 + $0x140] sm:$0xff] %v624
        %641 = vst [vmem:[%s176 + $0x160] sm:$0xff] %v625
        %642 = vst [vmem:[%s176 + $0x180] sm:$0xff] %v626
        %643 = vst [vmem:[%s176 + $0x1a0] sm:$0xff] %v627
        %644 = vst [vmem:[%s176 + $0x1c0] sm:$0xff] %v628
        %645 = vst [vmem:[%s176 + $0x1e0] sm:$0xff] %v629
        %s646 = scalar_lea.vmem %s185, 256
        %v647 = vld [vmem:[%s646] sm:$0xff]
        %v648 = vld [vmem:[%s646 + $0x8] sm:$0xff]
        %v649 = vld [vmem:[%s646 + $0x10] sm:$0xff]
        %v650 = vld [vmem:[%s646 + $0x18] sm:$0xff]
        %v651 = vld [vmem:[%s646 + $0x20] sm:$0xff]
        %v652 = vld [vmem:[%s646 + $0x28] sm:$0xff]
        %v653 = vld [vmem:[%s646 + $0x30] sm:$0xff]
        %v654 = vld [vmem:[%s646 + $0x38] sm:$0xff]
        %v655 = vld [vmem:[%s646 + $0x40] sm:$0xff]
        %v656 = vld [vmem:[%s646 + $0x48] sm:$0xff]
        %v657 = vld [vmem:[%s646 + $0x50] sm:$0xff]
        %v658 = vld [vmem:[%s646 + $0x58] sm:$0xff]
        %v659 = vld [vmem:[%s646 + $0x60] sm:$0xff]
        %v660 = vld [vmem:[%s646 + $0x68] sm:$0xff]
        %v661 = vld [vmem:[%s646 + $0x70] sm:$0xff]
        %v662 = vld [vmem:[%s646 + $0x78] sm:$0xff]
        %s663 = scalar_lea.vmem %s191, 256
        %v664 = vld [vmem:[%s663] sm:$0xff]
        %v665 = vld [vmem:[%s663 + $0x8] sm:$0xff]
        %v666 = vld [vmem:[%s663 + $0x10] sm:$0xff]
        %v667 = vld [vmem:[%s663 + $0x18] sm:$0xff]
        %v668 = vld [vmem:[%s663 + $0x20] sm:$0xff]
        %v669 = vld [vmem:[%s663 + $0x28] sm:$0xff]
        %v670 = vld [vmem:[%s663 + $0x30] sm:$0xff]
        %v671 = vld [vmem:[%s663 + $0x38] sm:$0xff]
        %v672 = vld [vmem:[%s663 + $0x40] sm:$0xff]
        %v673 = vld [vmem:[%s663 + $0x48] sm:$0xff]
        %v674 = vld [vmem:[%s663 + $0x50] sm:$0xff]
        %v675 = vld [vmem:[%s663 + $0x58] sm:$0xff]
        %v676 = vld [vmem:[%s663 + $0x60] sm:$0xff]
        %v677 = vld [vmem:[%s663 + $0x68] sm:$0xff]
        %v678 = vld [vmem:[%s663 + $0x70] sm:$0xff]
        %v679 = vld [vmem:[%s663 + $0x78] sm:$0xff]
        %680 = vmatprep.subr.mxu0 0.0
        %681 = vmatpush1.msra.mxu0 %v664
        %682 = vmatprep.subr.mxu0 0.0
        %683 = vmatpush1.msra.mxu0 %v665
        %684 = vmatprep.subr.mxu0 0.0
        %685 = vmatpush1.msra.mxu0 %v666
        %686 = vmatprep.subr.mxu0 0.0
        %687 = vmatpush1.msra.mxu0 %v667
        %688 = vmatprep.subr.mxu0 0.0
        %689 = vmatpush1.msra.mxu0 %v668
        %690 = vmatprep.subr.mxu0 0.0
        %691 = vmatpush1.msra.mxu0 %v669
        %692 = vmatprep.subr.mxu0 0.0
        %693 = vmatpush1.msra.mxu0 %v670
        %694 = vmatprep.subr.mxu0 0.0
        %695 = vmatpush1.msra.mxu0 %v671
        %696 = vmatprep.subr.mxu0 0.0
        %697 = vmatpush1.msra.mxu0 %v672
        %698 = vmatprep.subr.mxu0 0.0
        %699 = vmatpush1.msra.mxu0 %v673
        %700 = vmatprep.subr.mxu0 0.0
        %701 = vmatpush1.msra.mxu0 %v674
        %702 = vmatprep.subr.mxu0 0.0
        %703 = vmatpush1.msra.mxu0 %v675
        %704 = vmatprep.subr.mxu0 0.0
        %705 = vmatpush1.msra.mxu0 %v676
        %706 = vmatprep.subr.mxu0 0.0
        %707 = vmatpush1.msra.mxu0 %v677
        %708 = vmatprep.subr.mxu0 0.0
        %709 = vmatpush1.msra.mxu0 %v678
        %710 = vmatprep.subr.mxu0 0.0
        %711 = vmatpush1.msra.mxu0 %v679
        %712 = vmatprep.subr.mxu0 0.0
        %713 = vmatpush1.msra.mxu0 0.0
        %714 = vmatprep.subr.mxu0 0.0
        %715 = vmatpush1.msra.mxu0 0.0
        %716 = vmatprep.subr.mxu0 0.0
        %717 = vmatpush1.msra.mxu0 0.0
        %718 = vmatprep.subr.mxu0 0.0
        %719 = vmatpush1.msra.mxu0 0.0
        %720 = vmatprep.subr.mxu0 0.0
        %721 = vmatpush1.msra.mxu0 0.0
        %722 = vmatprep.subr.mxu0 0.0
        %723 = vmatpush1.msra.mxu0 0.0
        %724 = vmatprep.subr.mxu0 0.0
        %725 = vmatpush1.msra.mxu0 0.0
        %726 = vmatprep.subr.mxu0 0.0
        %727 = vmatpush1.msra.mxu0 0.0
        %728 = vmatprep.subr.mxu0 0.0
        %729 = vmatpush1.msra.mxu0 0.0
        %730 = vmatprep.subr.mxu0 0.0
        %731 = vmatpush1.msra.mxu0 0.0
        %732 = vmatprep.subr.mxu0 0.0
        %733 = vmatpush1.msra.mxu0 0.0
        %734 = vmatprep.subr.mxu0 0.0
        %735 = vmatpush1.msra.mxu0 0.0
        %736 = vmatprep.subr.mxu0 0.0
        %737 = vmatpush1.msra.mxu0 0.0
        %738 = vmatprep.subr.mxu0 0.0
        %739 = vmatpush1.msra.mxu0 0.0
        %740 = vmatprep.subr.mxu0 0.0
        %741 = vmatpush1.msra.mxu0 0.0
        %742 = vmatprep.subr.mxu0 0.0
        %743 = vmatpush1.msra.mxu0 0.0
        %744 = vmatprep.mubr.f32.mxu0 0.0
        %745 = vmatmul.mubr.f32.gmra.mrb[0].mxu0 %v647
        %v746 = vpop.f32.mrb[0].mxu0
        %v747 = vadd.f32 0.0, %v746
        %v748 = vpop.f32.mrb[0].mxu0
        %749 = vmatprep.mubr.f32.mxu0 0.0
        %750 = vmatmul.mubr.f32.gmra.mrb[0].mxu0 %v648
        %v751 = vpop.f32.mrb[0].mxu0
        %v752 = vadd.f32 0.0, %v751
        %v753 = vpop.f32.mrb[0].mxu0
        %754 = vmatprep.mubr.f32.mxu0 0.0
        %755 = vmatmul.mubr.f32.gmra.mrb[0].mxu0 %v649
        %v756 = vpop.f32.mrb[0].mxu0
        %v757 = vadd.f32 0.0, %v756
        %v758 = vpop.f32.mrb[0].mxu0
        %759 = vmatprep.mubr.f32.mxu0 0.0
        %760 = vmatmul.mubr.f32.gmra.mrb[0].mxu0 %v650
        %v761 = vpop.f32.mrb[0].mxu0
        %v762 = vadd.f32 0.0, %v761
        %v763 = vpop.f32.mrb[0].mxu0
        %764 = vmatprep.mubr.f32.mxu0 0.0
        %765 = vmatmul.mubr.f32.gmra.mrb[0].mxu0 %v651
        %v766 = vpop.f32.mrb[0].mxu0
        %v767 = vadd.f32 0.0, %v766
        %v768 = vpop.f32.mrb[0].mxu0
        %769 = vmatprep.mubr.f32.mxu0 0.0
        %770 = vmatmul.mubr.f32.gmra.mrb[0].mxu0 %v652
        %v771 = vpop.f32.mrb[0].mxu0
        %v772 = vadd.f32 0.0, %v771
        %v773 = vpop.f32.mrb[0].mxu0
        %774 = vmatprep.mubr.f32.mxu0 0.0
        %775 = vmatmul.mubr.f32.gmra.mrb[0].mxu0 %v653
        %v776 = vpop.f32.mrb[0].mxu0
        %v777 = vadd.f32 0.0, %v776
        %v778 = vpop.f32.mrb[0].mxu0
        %779 = vmatprep.mubr.f32.mxu0 0.0
        %780 = vmatmul.mubr.f32.gmra.mrb[0].mxu0 %v654
        %v781 = vpop.f32.mrb[0].mxu0
        %v782 = vadd.f32 0.0, %v781
        %v783 = vpop.f32.mrb[0].mxu0
        %784 = vmatprep.mubr.f32.mxu0 0.0
        %785 = vmatmul.mubr.f32.gmra.mrb[0].mxu0 %v655
        %v786 = vpop.f32.mrb[0].mxu0
        %v787 = vadd.f32 0.0, %v786
        %v788 = vpop.f32.mrb[0].mxu0
        %789 = vmatprep.mubr.f32.mxu0 0.0
        %790 = vmatmul.mubr.f32.gmra.mrb[0].mxu0 %v656
        %v791 = vpop.f32.mrb[0].mxu0
        %v792 = vadd.f32 0.0, %v791
        %v793 = vpop.f32.mrb[0].mxu0
        %794 = vmatprep.mubr.f32.mxu0 0.0
        %795 = vmatmul.mubr.f32.gmra.mrb[0].mxu0 %v657
        %v796 = vpop.f32.mrb[0].mxu0
        %v797 = vadd.f32 0.0, %v796
        %v798 = vpop.f32.mrb[0].mxu0
        %799 = vmatprep.mubr.f32.mxu0 0.0
        %800 = vmatmul.mubr.f32.gmra.mrb[0].mxu0 %v658
        %v801 = vpop.f32.mrb[0].mxu0
        %v802 = vadd.f32 0.0, %v801
        %v803 = vpop.f32.mrb[0].mxu0
        %804 = vmatprep.mubr.f32.mxu0 0.0
        %805 = vmatmul.mubr.f32.gmra.mrb[0].mxu0 %v659
        %v806 = vpop.f32.mrb[0].mxu0
        %v807 = vadd.f32 0.0, %v806
        %v808 = vpop.f32.mrb[0].mxu0
        %809 = vmatprep.mubr.f32.mxu0 0.0
        %810 = vmatmul.mubr.f32.gmra.mrb[0].mxu0 %v660
        %v811 = vpop.f32.mrb[0].mxu0
        %v812 = vadd.f32 0.0, %v811
        %v813 = vpop.f32.mrb[0].mxu0
        %814 = vmatprep.mubr.f32.mxu0 0.0
        %815 = vmatmul.mubr.f32.gmra.mrb[0].mxu0 %v661
        %v816 = vpop.f32.mrb[0].mxu0
        %v817 = vadd.f32 0.0, %v816
        %v818 = vpop.f32.mrb[0].mxu0
        %819 = vmatprep.mubr.f32.mxu0 0.0
        %820 = vmatmul.mubr.f32.gmra.mrb[0].mxu0 %v662
        %v821 = vpop.f32.mrb[0].mxu0
        %v822 = vadd.f32 0.0, %v821
        %v823 = vpop.f32.mrb[0].mxu0
        %824 = vdwg.mxu0
        %s825 = scalar_lea.vmem %s185, 384
        %v826 = vld [vmem:[%s825] sm:$0xff]
        %v827 = vld [vmem:[%s825 + $0x8] sm:$0xff]
        %v828 = vld [vmem:[%s825 + $0x10] sm:$0xff]
        %v829 = vld [vmem:[%s825 + $0x18] sm:$0xff]
        %v830 = vld [vmem:[%s825 + $0x20] sm:$0xff]
        %v831 = vld [vmem:[%s825 + $0x28] sm:$0xff]
        %v832 = vld [vmem:[%s825 + $0x30] sm:$0xff]
        %v833 = vld [vmem:[%s825 + $0x38] sm:$0xff]
        %v834 = vld [vmem:[%s825 + $0x40] sm:$0xff]
        %v835 = vld [vmem:[%s825 + $0x48] sm:$0xff]
        %v836 = vld [vmem:[%s825 + $0x50] sm:$0xff]
        %v837 = vld [vmem:[%s825 + $0x58] sm:$0xff]
        %v838 = vld [vmem:[%s825 + $0x60] sm:$0xff]
        %v839 = vld [vmem:[%s825 + $0x68] sm:$0xff]
        %v840 = vld [vmem:[%s825 + $0x70] sm:$0xff]
        %v841 = vld [vmem:[%s825 + $0x78] sm:$0xff]
        %s842 = scalar_lea.vmem %s191, 384
        %v843 = vld [vmem:[%s842] sm:$0xff]
        %v844 = vld [vmem:[%s842 + $0x8] sm:$0xff]
        %v845 = vld [vmem:[%s842 + $0x10] sm:$0xff]
        %v846 = vld [vmem:[%s842 + $0x18] sm:$0xff]
        %v847 = vld [vmem:[%s842 + $0x20] sm:$0xff]
        %v848 = vld [vmem:[%s842 + $0x28] sm:$0xff]
        %v849 = vld [vmem:[%s842 + $0x30] sm:$0xff]
        %v850 = vld [vmem:[%s842 + $0x38] sm:$0xff]
        %v851 = vld [vmem:[%s842 + $0x40] sm:$0xff]
        %v852 = vld [vmem:[%s842 + $0x48] sm:$0xff]
        %v853 = vld [vmem:[%s842 + $0x50] sm:$0xff]
        %v854 = vld [vmem:[%s842 + $0x58] sm:$0xff]
        %v855 = vld [vmem:[%s842 + $0x60] sm:$0xff]
        %v856 = vld [vmem:[%s842 + $0x68] sm:$0xff]
        %v857 = vld [vmem:[%s842 + $0x70] sm:$0xff]
        %v858 = vld [vmem:[%s842 + $0x78] sm:$0xff]
        %859 = vmatprep.subr.mxu0 0.0
        %860 = vmatpush1.msra.mxu0 %v843
        %861 = vmatprep.subr.mxu0 0.0
        %862 = vmatpush1.msra.mxu0 %v844
        %863 = vmatprep.subr.mxu0 0.0
        %864 = vmatpush1.msra.mxu0 %v845
        %865 = vmatprep.subr.mxu0 0.0
        %866 = vmatpush1.msra.mxu0 %v846
        %867 = vmatprep.subr.mxu0 0.0
        %868 = vmatpush1.msra.mxu0 %v847
        %869 = vmatprep.subr.mxu0 0.0
        %870 = vmatpush1.msra.mxu0 %v848
        %871 = vmatprep.subr.mxu0 0.0
        %872 = vmatpush1.msra.mxu0 %v849
        %873 = vmatprep.subr.mxu0 0.0
        %874 = vmatpush1.msra.mxu0 %v850
        %875 = vmatprep.subr.mxu0 0.0
        %876 = vmatpush1.msra.mxu0 %v851
        %877 = vmatprep.subr.mxu0 0.0
        %878 = vmatpush1.msra.mxu0 %v852
        %879 = vmatprep.subr.mxu0 0.0
        %880 = vmatpush1.msra.mxu0 %v853
        %881 = vmatprep.subr.mxu0 0.0
        %882 = vmatpush1.msra.mxu0 %v854
        %883 = vmatprep.subr.mxu0 0.0
        %884 = vmatpush1.msra.mxu0 %v855
        %885 = vmatprep.subr.mxu0 0.0
        %886 = vmatpush1.msra.mxu0 %v856
        %887 = vmatprep.subr.mxu0 0.0
        %888 = vmatpush1.msra.mxu0 %v857
        %889 = vmatprep.subr.mxu0 0.0
        %890 = vmatpush1.msra.mxu0 %v858
        %891 = vmatprep.subr.mxu0 0.0
        %892 = vmatpush1.msra.mxu0 0.0
        %893 = vmatprep.subr.mxu0 0.0
        %894 = vmatpush1.msra.mxu0 0.0
        %895 = vmatprep.subr.mxu0 0.0
        %896 = vmatpush1.msra.mxu0 0.0
        %897 = vmatprep.subr.mxu0 0.0
        %898 = vmatpush1.msra.mxu0 0.0
        %899 = vmatprep.subr.mxu0 0.0
        %900 = vmatpush1.msra.mxu0 0.0
        %901 = vmatprep.subr.mxu0 0.0
        %902 = vmatpush1.msra.mxu0 0.0
        %903 = vmatprep.subr.mxu0 0.0
        %904 = vmatpush1.msra.mxu0 0.0
        %905 = vmatprep.subr.mxu0 0.0
        %906 = vmatpush1.msra.mxu0 0.0
        %907 = vmatprep.subr.mxu0 0.0
        %908 = vmatpush1.msra.mxu0 0.0
        %909 = vmatprep.subr.mxu0 0.0
        %910 = vmatpush1.msra.mxu0 0.0
        %911 = vmatprep.subr.mxu0 0.0
        %912 = vmatpush1.msra.mxu0 0.0
        %913 = vmatprep.subr.mxu0 0.0
        %914 = vmatpush1.msra.mxu0 0.0
        %915 = vmatprep.subr.mxu0 0.0
        %916 = vmatpush1.msra.mxu0 0.0
        %917 = vmatprep.subr.mxu0 0.0
        %918 = vmatpush1.msra.mxu0 0.0
        %919 = vmatprep.subr.mxu0 0.0
        %920 = vmatpush1.msra.mxu0 0.0
        %921 = vmatprep.subr.mxu0 0.0
        %922 = vmatpush1.msra.mxu0 0.0
        %923 = vmatprep.mubr.f32.mxu0 0.0
        %924 = vmatmul.mubr.f32.gmra.mrb[0].mxu0 %v826
        %v925 = vpop.f32.mrb[0].mxu0
        %v926 = vadd.f32 0.0, %v925
        %v927 = vpop.f32.mrb[0].mxu0
        %928 = vmatprep.mubr.f32.mxu0 0.0
        %929 = vmatmul.mubr.f32.gmra.mrb[0].mxu0 %v827
        %v930 = vpop.f32.mrb[0].mxu0
        %v931 = vadd.f32 0.0, %v930
        %v932 = vpop.f32.mrb[0].mxu0
        %933 = vmatprep.mubr.f32.mxu0 0.0
        %934 = vmatmul.mubr.f32.gmra.mrb[0].mxu0 %v828
        %v935 = vpop.f32.mrb[0].mxu0
        %v936 = vadd.f32 0.0, %v935
        %v937 = vpop.f32.mrb[0].mxu0
        %938 = vmatprep.mubr.f32.mxu0 0.0
        %939 = vmatmul.mubr.f32.gmra.mrb[0].mxu0 %v829
        %v940 = vpop.f32.mrb[0].mxu0
        %v941 = vadd.f32 0.0, %v940
        %v942 = vpop.f32.mrb[0].mxu0
        %943 = vmatprep.mubr.f32.mxu0 0.0
        %944 = vmatmul.mubr.f32.gmra.mrb[0].mxu0 %v830
        %v945 = vpop.f32.mrb[0].mxu0
        %v946 = vadd.f32 0.0, %v945
        %v947 = vpop.f32.mrb[0].mxu0
        %948 = vmatprep.mubr.f32.mxu0 0.0
        %949 = vmatmul.mubr.f32.gmra.mrb[0].mxu0 %v831
        %v950 = vpop.f32.mrb[0].mxu0
        %v951 = vadd.f32 0.0, %v950
        %v952 = vpop.f32.mrb[0].mxu0
        %953 = vmatprep.mubr.f32.mxu0 0.0
        %954 = vmatmul.mubr.f32.gmra.mrb[0].mxu0 %v832
        %v955 = vpop.f32.mrb[0].mxu0
        %v956 = vadd.f32 0.0, %v955
        %v957 = vpop.f32.mrb[0].mxu0
        %958 = vmatprep.mubr.f32.mxu0 0.0
        %959 = vmatmul.mubr.f32.gmra.mrb[0].mxu0 %v833
        %v960 = vpop.f32.mrb[0].mxu0
        %v961 = vadd.f32 0.0, %v960
        %v962 = vpop.f32.mrb[0].mxu0
        %963 = vmatprep.mubr.f32.mxu0 0.0
        %964 = vmatmul.mubr.f32.gmra.mrb[0].mxu0 %v834
        %v965 = vpop.f32.mrb[0].mxu0
        %v966 = vadd.f32 0.0, %v965
        %v967 = vpop.f32.mrb[0].mxu0
        %968 = vmatprep.mubr.f32.mxu0 0.0
        %969 = vmatmul.mubr.f32.gmra.mrb[0].mxu0 %v835
        %v970 = vpop.f32.mrb[0].mxu0
        %v971 = vadd.f32 0.0, %v970
        %v972 = vpop.f32.mrb[0].mxu0
        %973 = vmatprep.mubr.f32.mxu0 0.0
        %974 = vmatmul.mubr.f32.gmra.mrb[0].mxu0 %v836
        %v975 = vpop.f32.mrb[0].mxu0
        %v976 = vadd.f32 0.0, %v975
        %v977 = vpop.f32.mrb[0].mxu0
        %978 = vmatprep.mubr.f32.mxu0 0.0
        %979 = vmatmul.mubr.f32.gmra.mrb[0].mxu0 %v837
        %v980 = vpop.f32.mrb[0].mxu0
        %v981 = vadd.f32 0.0, %v980
        %v982 = vpop.f32.mrb[0].mxu0
        %983 = vmatprep.mubr.f32.mxu0 0.0
        %984 = vmatmul.mubr.f32.gmra.mrb[0].mxu0 %v838
        %v985 = vpop.f32.mrb[0].mxu0
        %v986 = vadd.f32 0.0, %v985
        %v987 = vpop.f32.mrb[0].mxu0
        %988 = vmatprep.mubr.f32.mxu0 0.0
        %989 = vmatmul.mubr.f32.gmra.mrb[0].mxu0 %v839
        %v990 = vpop.f32.mrb[0].mxu0
        %v991 = vadd.f32 0.0, %v990
        %v992 = vpop.f32.mrb[0].mxu0
        %993 = vmatprep.mubr.f32.mxu0 0.0
        %994 = vmatmul.mubr.f32.gmra.mrb[0].mxu0 %v840
        %v995 = vpop.f32.mrb[0].mxu0
        %v996 = vadd.f32 0.0, %v995
        %v997 = vpop.f32.mrb[0].mxu0
        %998 = vmatprep.mubr.f32.mxu0 0.0
        %999 = vmatmul.mubr.f32.gmra.mrb[0].mxu0 %v841
        %v1000 = vpop.f32.mrb[0].mxu0
        %v1001 = vadd.f32 0.0, %v1000
        %v1002 = vpop.f32.mrb[0].mxu0
        %1003 = vdwg.mxu0
        %1020 = vrot.lane.b32.xlu0 %v926, 64
        %v1021 = vpop.permute.xlu0 %1020
        %1022 = vrot.lane.b32.xlu0 %v931, 64
        %v1023 = vpop.permute.xlu0 %1022
        %1024 = vrot.lane.b32.xlu0 %v936, 64
        %v1025 = vpop.permute.xlu0 %1024
        %1026 = vrot.lane.b32.xlu0 %v941, 64
        %v1027 = vpop.permute.xlu0 %1026
        %1028 = vrot.lane.b32.xlu0 %v946, 64
        %v1029 = vpop.permute.xlu0 %1028
        %1030 = vrot.lane.b32.xlu0 %v951, 64
        %v1031 = vpop.permute.xlu0 %1030
        %1032 = vrot.lane.b32.xlu0 %v956, 64
        %v1033 = vpop.permute.xlu0 %1032
        %1034 = vrot.lane.b32.xlu0 %v961, 64
        %v1035 = vpop.permute.xlu0 %1034
        %1036 = vrot.lane.b32.xlu0 %v966, 64
        %v1037 = vpop.permute.xlu0 %1036
        %1038 = vrot.lane.b32.xlu0 %v971, 64
        %v1039 = vpop.permute.xlu0 %1038
        %1040 = vrot.lane.b32.xlu0 %v976, 64
        %v1041 = vpop.permute.xlu0 %1040
        %1042 = vrot.lane.b32.xlu0 %v981, 64
        %v1043 = vpop.permute.xlu0 %1042
        %1044 = vrot.lane.b32.xlu0 %v986, 64
        %v1045 = vpop.permute.xlu0 %1044
        %1046 = vrot.lane.b32.xlu0 %v991, 64
        %v1047 = vpop.permute.xlu0 %1046
        %1048 = vrot.lane.b32.xlu0 %v996, 64
        %v1049 = vpop.permute.xlu0 %1048
        %1050 = vrot.lane.b32.xlu0 %v1001, 64
        %v1051 = vpop.permute.xlu0 %1050
        %v1068 = vsel %vm613, %v747, %v1021
        %v1069 = vsel %vm613, %v752, %v1023
        %v1070 = vsel %vm613, %v757, %v1025
        %v1071 = vsel %vm613, %v762, %v1027
        %v1072 = vsel %vm613, %v767, %v1029
        %v1073 = vsel %vm613, %v772, %v1031
        %v1074 = vsel %vm613, %v777, %v1033
        %v1075 = vsel %vm613, %v782, %v1035
        %v1076 = vsel %vm613, %v787, %v1037
        %v1077 = vsel %vm613, %v792, %v1039
        %v1078 = vsel %vm613, %v797, %v1041
        %v1079 = vsel %vm613, %v802, %v1043
        %v1080 = vsel %vm613, %v807, %v1045
        %v1081 = vsel %vm613, %v812, %v1047
        %v1082 = vsel %vm613, %v817, %v1049
        %v1083 = vsel %vm613, %v822, %v1051
        %1084 = vst [vmem:[%s176 + $0x8] sm:$0xff] %v1068
        %1085 = vst [vmem:[%s176 + $0x28] sm:$0xff] %v1069
        %1086 = vst [vmem:[%s176 + $0x48] sm:$0xff] %v1070
        %1087 = vst [vmem:[%s176 + $0x68] sm:$0xff] %v1071
        %1088 = vst [vmem:[%s176 + $0x88] sm:$0xff] %v1072
        %1089 = vst [vmem:[%s176 + $0xa8] sm:$0xff] %v1073
        %1090 = vst [vmem:[%s176 + $0xc8] sm:$0xff] %v1074
        %1091 = vst [vmem:[%s176 + $0xe8] sm:$0xff] %v1075
        %1092 = vst [vmem:[%s176 + $0x108] sm:$0xff] %v1076
        %1093 = vst [vmem:[%s176 + $0x128] sm:$0xff] %v1077
        %1094 = vst [vmem:[%s176 + $0x148] sm:$0xff] %v1078
        %1095 = vst [vmem:[%s176 + $0x168] sm:$0xff] %v1079
        %1096 = vst [vmem:[%s176 + $0x188] sm:$0xff] %v1080
        %1097 = vst [vmem:[%s176 + $0x1a8] sm:$0xff] %v1081
        %1098 = vst [vmem:[%s176 + $0x1c8] sm:$0xff] %v1082
        %1099 = vst [vmem:[%s176 + $0x1e8] sm:$0xff] %v1083
        %s1100 = scalar_lea.vmem %s185, 512
        %v1101 = vld [vmem:[%s1100] sm:$0xff]
        %v1102 = vld [vmem:[%s1100 + $0x8] sm:$0xff]
        %v1103 = vld [vmem:[%s1100 + $0x10] sm:$0xff]
        %v1104 = vld [vmem:[%s1100 + $0x18] sm:$0xff]
        %v1105 = vld [vmem:[%s1100 + $0x20] sm:$0xff]
        %v1106 = vld [vmem:[%s1100 + $0x28] sm:$0xff]
        %v1107 = vld [vmem:[%s1100 + $0x30] sm:$0xff]
        %v1108 = vld [vmem:[%s1100 + $0x38] sm:$0xff]
        %v1109 = vld [vmem:[%s1100 + $0x40] sm:$0xff]
        %v1110 = vld [vmem:[%s1100 + $0x48] sm:$0xff]
        %v1111 = vld [vmem:[%s1100 + $0x50] sm:$0xff]
        %v1112 = vld [vmem:[%s1100 + $0x58] sm:$0xff]
        %v1113 = vld [vmem:[%s1100 + $0x60] sm:$0xff]
        %v1114 = vld [vmem:[%s1100 + $0x68] sm:$0xff]
        %v1115 = vld [vmem:[%s1100 + $0x70] sm:$0xff]
        %v1116 = vld [vmem:[%s1100 + $0x78] sm:$0xff]
        %s1117 = scalar_lea.vmem %s191, 512
        %v1118 = vld [vmem:[%s1117] sm:$0xff]
        %v1119 = vld [vmem:[%s1117 + $0x8] sm:$0xff]
        %v1120 = vld [vmem:[%s1117 + $0x10] sm:$0xff]
        %v1121 = vld [vmem:[%s1117 + $0x18] sm:$0xff]
        %v1122 = vld [vmem:[%s1117 + $0x20] sm:$0xff]
        %v1123 = vld [vmem:[%s1117 + $0x28] sm:$0xff]
        %v1124 = vld [vmem:[%s1117 + $0x30] sm:$0xff]
        %v1125 = vld [vmem:[%s1117 + $0x38] sm:$0xff]
        %v1126 = vld [vmem:[%s1117 + $0x40] sm:$0xff]
        %v1127 = vld [vmem:[%s1117 + $0x48] sm:$0xff]
        %v1128 = vld [vmem:[%s1117 + $0x50] sm:$0xff]
        %v1129 = vld [vmem:[%s1117 + $0x58] sm:$0xff]
        %v1130 = vld [vmem:[%s1117 + $0x60] sm:$0xff]
        %v1131 = vld [vmem:[%s1117 + $0x68] sm:$0xff]
        %v1132 = vld [vmem:[%s1117 + $0x70] sm:$0xff]
        %v1133 = vld [vmem:[%s1117 + $0x78] sm:$0xff]
        %1134 = vmatprep.subr.mxu0 0.0
        %1135 = vmatpush1.msra.mxu0 %v1118
        %1136 = vmatprep.subr.mxu0 0.0
        %1137 = vmatpush1.msra.mxu0 %v1119
        %1138 = vmatprep.subr.mxu0 0.0
        %1139 = vmatpush1.msra.mxu0 %v1120
        %1140 = vmatprep.subr.mxu0 0.0
        %1141 = vmatpush1.msra.mxu0 %v1121
        %1142 = vmatprep.subr.mxu0 0.0
        %1143 = vmatpush1.msra.mxu0 %v1122
        %1144 = vmatprep.subr.mxu0 0.0
        %1145 = vmatpush1.msra.mxu0 %v1123
        %1146 = vmatprep.subr.mxu0 0.0
        %1147 = vmatpush1.msra.mxu0 %v1124
        %1148 = vmatprep.subr.mxu0 0.0
        %1149 = vmatpush1.msra.mxu0 %v1125
        %1150 = vmatprep.subr.mxu0 0.0
        %1151 = vmatpush1.msra.mxu0 %v1126
        %1152 = vmatprep.subr.mxu0 0.0
        %1153 = vmatpush1.msra.mxu0 %v1127
        %1154 = vmatprep.subr.mxu0 0.0
        %1155 = vmatpush1.msra.mxu0 %v1128
        %1156 = vmatprep.subr.mxu0 0.0
        %1157 = vmatpush1.msra.mxu0 %v1129
        %1158 = vmatprep.subr.mxu0 0.0
        %1159 = vmatpush1.msra.mxu0 %v1130
        %1160 = vmatprep.subr.mxu0 0.0
        %1161 = vmatpush1.msra.mxu0 %v1131
        %1162 = vmatprep.subr.mxu0 0.0
        %1163 = vmatpush1.msra.mxu0 %v1132
        %1164 = vmatprep.subr.mxu0 0.0
        %1165 = vmatpush1.msra.mxu0 %v1133
        %1166 = vmatprep.subr.mxu0 0.0
        %1167 = vmatpush1.msra.mxu0 0.0
        %1168 = vmatprep.subr.mxu0 0.0
        %1169 = vmatpush1.msra.mxu0 0.0
        %1170 = vmatprep.subr.mxu0 0.0
        %1171 = vmatpush1.msra.mxu0 0.0
        %1172 = vmatprep.subr.mxu0 0.0
        %1173 = vmatpush1.msra.mxu0 0.0
        %1174 = vmatprep.subr.mxu0 0.0
        %1175 = vmatpush1.msra.mxu0 0.0
        %1176 = vmatprep.subr.mxu0 0.0
        %1177 = vmatpush1.msra.mxu0 0.0
        %1178 = vmatprep.subr.mxu0 0.0
        %1179 = vmatpush1.msra.mxu0 0.0
        %1180 = vmatprep.subr.mxu0 0.0
        %1181 = vmatpush1.msra.mxu0 0.0
        %1182 = vmatprep.subr.mxu0 0.0
        %1183 = vmatpush1.msra.mxu0 0.0
        %1184 = vmatprep.subr.mxu0 0.0
        %1185 = vmatpush1.msra.mxu0 0.0
        %1186 = vmatprep.subr.mxu0 0.0
        %1187 = vmatpush1.msra.mxu0 0.0
        %1188 = vmatprep.subr.mxu0 0.0
        %1189 = vmatpush1.msra.mxu0 0.0
        %1190 = vmatprep.subr.mxu0 0.0
        %1191 = vmatpush1.msra.mxu0 0.0
        %1192 = vmatprep.subr.mxu0 0.0
        %1193 = vmatpush1.msra.mxu0 0.0
        %1194 = vmatprep.subr.mxu0 0.0
        %1195 = vmatpush1.msra.mxu0 0.0
        %1196 = vmatprep.subr.mxu0 0.0
        %1197 = vmatpush1.msra.mxu0 0.0
        %1198 = vmatprep.mubr.f32.mxu0 0.0
        %1199 = vmatmul.mubr.f32.gmra.mrb[0].mxu0 %v1101
        %v1200 = vpop.f32.mrb[0].mxu0
        %v1201 = vadd.f32 0.0, %v1200
        %v1202 = vpop.f32.mrb[0].mxu0
        %1203 = vmatprep.mubr.f32.mxu0 0.0
        %1204 = vmatmul.mubr.f32.gmra.mrb[0].mxu0 %v1102
        %v1205 = vpop.f32.mrb[0].mxu0
        %v1206 = vadd.f32 0.0, %v1205
        %v1207 = vpop.f32.mrb[0].mxu0
        %1208 = vmatprep.mubr.f32.mxu0 0.0
        %1209 = vmatmul.mubr.f32.gmra.mrb[0].mxu0 %v1103
        %v1210 = vpop.f32.mrb[0].mxu0
        %v1211 = vadd.f32 0.0, %v1210
        %v1212 = vpop.f32.mrb[0].mxu0
        %1213 = vmatprep.mubr.f32.mxu0 0.0
        %1214 = vmatmul.mubr.f32.gmra.mrb[0].mxu0 %v1104
        %v1215 = vpop.f32.mrb[0].mxu0
        %v1216 = vadd.f32 0.0, %v1215
        %v1217 = vpop.f32.mrb[0].mxu0
        %1218 = vmatprep.mubr.f32.mxu0 0.0
        %1219 = vmatmul.mubr.f32.gmra.mrb[0].mxu0 %v1105
        %v1220 = vpop.f32.mrb[0].mxu0
        %v1221 = vadd.f32 0.0, %v1220
        %v1222 = vpop.f32.mrb[0].mxu0
        %1223 = vmatprep.mubr.f32.mxu0 0.0
        %1224 = vmatmul.mubr.f32.gmra.mrb[0].mxu0 %v1106
        %v1225 = vpop.f32.mrb[0].mxu0
        %v1226 = vadd.f32 0.0, %v1225
        %v1227 = vpop.f32.mrb[0].mxu0
        %1228 = vmatprep.mubr.f32.mxu0 0.0
        %1229 = vmatmul.mubr.f32.gmra.mrb[0].mxu0 %v1107
        %v1230 = vpop.f32.mrb[0].mxu0
        %v1231 = vadd.f32 0.0, %v1230
        %v1232 = vpop.f32.mrb[0].mxu0
        %1233 = vmatprep.mubr.f32.mxu0 0.0
        %1234 = vmatmul.mubr.f32.gmra.mrb[0].mxu0 %v1108
        %v1235 = vpop.f32.mrb[0].mxu0
        %v1236 = vadd.f32 0.0, %v1235
        %v1237 = vpop.f32.mrb[0].mxu0
        %1238 = vmatprep.mubr.f32.mxu0 0.0
        %1239 = vmatmul.mubr.f32.gmra.mrb[0].mxu0 %v1109
        %v1240 = vpop.f32.mrb[0].mxu0
        %v1241 = vadd.f32 0.0, %v1240
        %v1242 = vpop.f32.mrb[0].mxu0
        %1243 = vmatprep.mubr.f32.mxu0 0.0
        %1244 = vmatmul.mubr.f32.gmra.mrb[0].mxu0 %v1110
        %v1245 = vpop.f32.mrb[0].mxu0
        %v1246 = vadd.f32 0.0, %v1245
        %v1247 = vpop.f32.mrb[0].mxu0
        %1248 = vmatprep.mubr.f32.mxu0 0.0
        %1249 = vmatmul.mubr.f32.gmra.mrb[0].mxu0 %v1111
        %v1250 = vpop.f32.mrb[0].mxu0
        %v1251 = vadd.f32 0.0, %v1250
        %v1252 = vpop.f32.mrb[0].mxu0
        %1253 = vmatprep.mubr.f32.mxu0 0.0
        %1254 = vmatmul.mubr.f32.gmra.mrb[0].mxu0 %v1112
        %v1255 = vpop.f32.mrb[0].mxu0
        %v1256 = vadd.f32 0.0, %v1255
        %v1257 = vpop.f32.mrb[0].mxu0
        %1258 = vmatprep.mubr.f32.mxu0 0.0
        %1259 = vmatmul.mubr.f32.gmra.mrb[0].mxu0 %v1113
        %v1260 = vpop.f32.mrb[0].mxu0
        %v1261 = vadd.f32 0.0, %v1260
        %v1262 = vpop.f32.mrb[0].mxu0
        %1263 = vmatprep.mubr.f32.mxu0 0.0
        %1264 = vmatmul.mubr.f32.gmra.mrb[0].mxu0 %v1114
        %v1265 = vpop.f32.mrb[0].mxu0
        %v1266 = vadd.f32 0.0, %v1265
        %v1267 = vpop.f32.mrb[0].mxu0
        %1268 = vmatprep.mubr.f32.mxu0 0.0
        %1269 = vmatmul.mubr.f32.gmra.mrb[0].mxu0 %v1115
        %v1270 = vpop.f32.mrb[0].mxu0
        %v1271 = vadd.f32 0.0, %v1270
        %v1272 = vpop.f32.mrb[0].mxu0
        %1273 = vmatprep.mubr.f32.mxu0 0.0
        %1274 = vmatmul.mubr.f32.gmra.mrb[0].mxu0 %v1116
        %v1275 = vpop.f32.mrb[0].mxu0
        %v1276 = vadd.f32 0.0, %v1275
        %v1277 = vpop.f32.mrb[0].mxu0
        %1278 = vdwg.mxu0
        %s1279 = scalar_lea.vmem %s185, 640
        %v1280 = vld [vmem:[%s1279] sm:$0xff]
        %v1281 = vld [vmem:[%s1279 + $0x8] sm:$0xff]
        %v1282 = vld [vmem:[%s1279 + $0x10] sm:$0xff]
        %v1283 = vld [vmem:[%s1279 + $0x18] sm:$0xff]
        %v1284 = vld [vmem:[%s1279 + $0x20] sm:$0xff]
        %v1285 = vld [vmem:[%s1279 + $0x28] sm:$0xff]
        %v1286 = vld [vmem:[%s1279 + $0x30] sm:$0xff]
        %v1287 = vld [vmem:[%s1279 + $0x38] sm:$0xff]
        %v1288 = vld [vmem:[%s1279 + $0x40] sm:$0xff]
        %v1289 = vld [vmem:[%s1279 + $0x48] sm:$0xff]
        %v1290 = vld [vmem:[%s1279 + $0x50] sm:$0xff]
        %v1291 = vld [vmem:[%s1279 + $0x58] sm:$0xff]
        %v1292 = vld [vmem:[%s1279 + $0x60] sm:$0xff]
        %v1293 = vld [vmem:[%s1279 + $0x68] sm:$0xff]
        %v1294 = vld [vmem:[%s1279 + $0x70] sm:$0xff]
        %v1295 = vld [vmem:[%s1279 + $0x78] sm:$0xff]
        %s1296 = scalar_lea.vmem %s191, 640
        %v1297 = vld [vmem:[%s1296] sm:$0xff]
        %v1298 = vld [vmem:[%s1296 + $0x8] sm:$0xff]
        %v1299 = vld [vmem:[%s1296 + $0x10] sm:$0xff]
        %v1300 = vld [vmem:[%s1296 + $0x18] sm:$0xff]
        %v1301 = vld [vmem:[%s1296 + $0x20] sm:$0xff]
        %v1302 = vld [vmem:[%s1296 + $0x28] sm:$0xff]
        %v1303 = vld [vmem:[%s1296 + $0x30] sm:$0xff]
        %v1304 = vld [vmem:[%s1296 + $0x38] sm:$0xff]
        %v1305 = vld [vmem:[%s1296 + $0x40] sm:$0xff]
        %v1306 = vld [vmem:[%s1296 + $0x48] sm:$0xff]
        %v1307 = vld [vmem:[%s1296 + $0x50] sm:$0xff]
        %v1308 = vld [vmem:[%s1296 + $0x58] sm:$0xff]
        %v1309 = vld [vmem:[%s1296 + $0x60] sm:$0xff]
        %v1310 = vld [vmem:[%s1296 + $0x68] sm:$0xff]
        %v1311 = vld [vmem:[%s1296 + $0x70] sm:$0xff]
        %v1312 = vld [vmem:[%s1296 + $0x78] sm:$0xff]
        %1313 = vmatprep.subr.mxu0 0.0
        %1314 = vmatpush1.msra.mxu0 %v1297
        %1315 = vmatprep.subr.mxu0 0.0
        %1316 = vmatpush1.msra.mxu0 %v1298
        %1317 = vmatprep.subr.mxu0 0.0
        %1318 = vmatpush1.msra.mxu0 %v1299
        %1319 = vmatprep.subr.mxu0 0.0
        %1320 = vmatpush1.msra.mxu0 %v1300
        %1321 = vmatprep.subr.mxu0 0.0
        %1322 = vmatpush1.msra.mxu0 %v1301
        %1323 = vmatprep.subr.mxu0 0.0
        %1324 = vmatpush1.msra.mxu0 %v1302
        %1325 = vmatprep.subr.mxu0 0.0
        %1326 = vmatpush1.msra.mxu0 %v1303
        %1327 = vmatprep.subr.mxu0 0.0
        %1328 = vmatpush1.msra.mxu0 %v1304
        %1329 = vmatprep.subr.mxu0 0.0
        %1330 = vmatpush1.msra.mxu0 %v1305
        %1331 = vmatprep.subr.mxu0 0.0
        %1332 = vmatpush1.msra.mxu0 %v1306
        %1333 = vmatprep.subr.mxu0 0.0
        %1334 = vmatpush1.msra.mxu0 %v1307
        %1335 = vmatprep.subr.mxu0 0.0
        %1336 = vmatpush1.msra.mxu0 %v1308
        %1337 = vmatprep.subr.mxu0 0.0
        %1338 = vmatpush1.msra.mxu0 %v1309
        %1339 = vmatprep.subr.mxu0 0.0
        %1340 = vmatpush1.msra.mxu0 %v1310
        %1341 = vmatprep.subr.mxu0 0.0
        %1342 = vmatpush1.msra.mxu0 %v1311
        %1343 = vmatprep.subr.mxu0 0.0
        %1344 = vmatpush1.msra.mxu0 %v1312
        %1345 = vmatprep.subr.mxu0 0.0
        %1346 = vmatpush1.msra.mxu0 0.0
        %1347 = vmatprep.subr.mxu0 0.0
        %1348 = vmatpush1.msra.mxu0 0.0
        %1349 = vmatprep.subr.mxu0 0.0
        %1350 = vmatpush1.msra.mxu0 0.0
        %1351 = vmatprep.subr.mxu0 0.0
        %1352 = vmatpush1.msra.mxu0 0.0
        %1353 = vmatprep.subr.mxu0 0.0
        %1354 = vmatpush1.msra.mxu0 0.0
        %1355 = vmatprep.subr.mxu0 0.0
        %1356 = vmatpush1.msra.mxu0 0.0
        %1357 = vmatprep.subr.mxu0 0.0
        %1358 = vmatpush1.msra.mxu0 0.0
        %1359 = vmatprep.subr.mxu0 0.0
        %1360 = vmatpush1.msra.mxu0 0.0
        %1361 = vmatprep.subr.mxu0 0.0
        %1362 = vmatpush1.msra.mxu0 0.0
        %1363 = vmatprep.subr.mxu0 0.0
        %1364 = vmatpush1.msra.mxu0 0.0
        %1365 = vmatprep.subr.mxu0 0.0
        %1366 = vmatpush1.msra.mxu0 0.0
        %1367 = vmatprep.subr.mxu0 0.0
        %1368 = vmatpush1.msra.mxu0 0.0
        %1369 = vmatprep.subr.mxu0 0.0
        %1370 = vmatpush1.msra.mxu0 0.0
        %1371 = vmatprep.subr.mxu0 0.0
        %1372 = vmatpush1.msra.mxu0 0.0
        %1373 = vmatprep.subr.mxu0 0.0
        %1374 = vmatpush1.msra.mxu0 0.0
        %1375 = vmatprep.subr.mxu0 0.0
        %1376 = vmatpush1.msra.mxu0 0.0
        %1377 = vmatprep.mubr.f32.mxu0 0.0
        %1378 = vmatmul.mubr.f32.gmra.mrb[0].mxu0 %v1280
        %v1379 = vpop.f32.mrb[0].mxu0
        %v1380 = vadd.f32 0.0, %v1379
        %v1381 = vpop.f32.mrb[0].mxu0
        %1382 = vmatprep.mubr.f32.mxu0 0.0
        %1383 = vmatmul.mubr.f32.gmra.mrb[0].mxu0 %v1281
        %v1384 = vpop.f32.mrb[0].mxu0
        %v1385 = vadd.f32 0.0, %v1384
        %v1386 = vpop.f32.mrb[0].mxu0
        %1387 = vmatprep.mubr.f32.mxu0 0.0
        %1388 = vmatmul.mubr.f32.gmra.mrb[0].mxu0 %v1282
        %v1389 = vpop.f32.mrb[0].mxu0
        %v1390 = vadd.f32 0.0, %v1389
        %v1391 = vpop.f32.mrb[0].mxu0
        %1392 = vmatprep.mubr.f32.mxu0 0.0
        %1393 = vmatmul.mubr.f32.gmra.mrb[0].mxu0 %v1283
        %v1394 = vpop.f32.mrb[0].mxu0
        %v1395 = vadd.f32 0.0, %v1394
        %v1396 = vpop.f32.mrb[0].mxu0
        %1397 = vmatprep.mubr.f32.mxu0 0.0
        %1398 = vmatmul.mubr.f32.gmra.mrb[0].mxu0 %v1284
        %v1399 = vpop.f32.mrb[0].mxu0
        %v1400 = vadd.f32 0.0, %v1399
        %v1401 = vpop.f32.mrb[0].mxu0
        %1402 = vmatprep.mubr.f32.mxu0 0.0
        %1403 = vmatmul.mubr.f32.gmra.mrb[0].mxu0 %v1285
        %v1404 = vpop.f32.mrb[0].mxu0
        %v1405 = vadd.f32 0.0, %v1404
        %v1406 = vpop.f32.mrb[0].mxu0
        %1407 = vmatprep.mubr.f32.mxu0 0.0
        %1408 = vmatmul.mubr.f32.gmra.mrb[0].mxu0 %v1286
        %v1409 = vpop.f32.mrb[0].mxu0
        %v1410 = vadd.f32 0.0, %v1409
        %v1411 = vpop.f32.mrb[0].mxu0
        %1412 = vmatprep.mubr.f32.mxu0 0.0
        %1413 = vmatmul.mubr.f32.gmra.mrb[0].mxu0 %v1287
        %v1414 = vpop.f32.mrb[0].mxu0
        %v1415 = vadd.f32 0.0, %v1414
        %v1416 = vpop.f32.mrb[0].mxu0
        %1417 = vmatprep.mubr.f32.mxu0 0.0
        %1418 = vmatmul.mubr.f32.gmra.mrb[0].mxu0 %v1288
        %v1419 = vpop.f32.mrb[0].mxu0
        %v1420 = vadd.f32 0.0, %v1419
        %v1421 = vpop.f32.mrb[0].mxu0
        %1422 = vmatprep.mubr.f32.mxu0 0.0
        %1423 = vmatmul.mubr.f32.gmra.mrb[0].mxu0 %v1289
        %v1424 = vpop.f32.mrb[0].mxu0
        %v1425 = vadd.f32 0.0, %v1424
        %v1426 = vpop.f32.mrb[0].mxu0
        %1427 = vmatprep.mubr.f32.mxu0 0.0
        %1428 = vmatmul.mubr.f32.gmra.mrb[0].mxu0 %v1290
        %v1429 = vpop.f32.mrb[0].mxu0
        %v1430 = vadd.f32 0.0, %v1429
        %v1431 = vpop.f32.mrb[0].mxu0
        %1432 = vmatprep.mubr.f32.mxu0 0.0
        %1433 = vmatmul.mubr.f32.gmra.mrb[0].mxu0 %v1291
        %v1434 = vpop.f32.mrb[0].mxu0
        %v1435 = vadd.f32 0.0, %v1434
        %v1436 = vpop.f32.mrb[0].mxu0
        %1437 = vmatprep.mubr.f32.mxu0 0.0
        %1438 = vmatmul.mubr.f32.gmra.mrb[0].mxu0 %v1292
        %v1439 = vpop.f32.mrb[0].mxu0
        %v1440 = vadd.f32 0.0, %v1439
        %v1441 = vpop.f32.mrb[0].mxu0
        %1442 = vmatprep.mubr.f32.mxu0 0.0
        %1443 = vmatmul.mubr.f32.gmra.mrb[0].mxu0 %v1293
        %v1444 = vpop.f32.mrb[0].mxu0
        %v1445 = vadd.f32 0.0, %v1444
        %v1446 = vpop.f32.mrb[0].mxu0
        %1447 = vmatprep.mubr.f32.mxu0 0.0
        %1448 = vmatmul.mubr.f32.gmra.mrb[0].mxu0 %v1294
        %v1449 = vpop.f32.mrb[0].mxu0
        %v1450 = vadd.f32 0.0, %v1449
        %v1451 = vpop.f32.mrb[0].mxu0
        %1452 = vmatprep.mubr.f32.mxu0 0.0
        %1453 = vmatmul.mubr.f32.gmra.mrb[0].mxu0 %v1295
        %v1454 = vpop.f32.mrb[0].mxu0
        %v1455 = vadd.f32 0.0, %v1454
        %v1456 = vpop.f32.mrb[0].mxu0
        %1457 = vdwg.mxu0
        %1474 = vrot.lane.b32.xlu0 %v1380, 64
        %v1475 = vpop.permute.xlu0 %1474
        %1476 = vrot.lane.b32.xlu0 %v1385, 64
        %v1477 = vpop.permute.xlu0 %1476
        %1478 = vrot.lane.b32.xlu0 %v1390, 64
        %v1479 = vpop.permute.xlu0 %1478
        %1480 = vrot.lane.b32.xlu0 %v1395, 64
        %v1481 = vpop.permute.xlu0 %1480
        %1482 = vrot.lane.b32.xlu0 %v1400, 64
        %v1483 = vpop.permute.xlu0 %1482
        %1484 = vrot.lane.b32.xlu0 %v1405, 64
        %v1485 = vpop.permute.xlu0 %1484
        %1486 = vrot.lane.b32.xlu0 %v1410, 64
        %v1487 = vpop.permute.xlu0 %1486
        %1488 = vrot.lane.b32.xlu0 %v1415, 64
        %v1489 = vpop.permute.xlu0 %1488
        %1490 = vrot.lane.b32.xlu0 %v1420, 64
        %v1491 = vpop.permute.xlu0 %1490
        %1492 = vrot.lane.b32.xlu0 %v1425, 64
        %v1493 = vpop.permute.xlu0 %1492
        %1494 = vrot.lane.b32.xlu0 %v1430, 64
        %v1495 = vpop.permute.xlu0 %1494
        %1496 = vrot.lane.b32.xlu0 %v1435, 64
        %v1497 = vpop.permute.xlu0 %1496
        %1498 = vrot.lane.b32.xlu0 %v1440, 64
        %v1499 = vpop.permute.xlu0 %1498
        %1500 = vrot.lane.b32.xlu0 %v1445, 64
        %v1501 = vpop.permute.xlu0 %1500
        %1502 = vrot.lane.b32.xlu0 %v1450, 64
        %v1503 = vpop.permute.xlu0 %1502
        %1504 = vrot.lane.b32.xlu0 %v1455, 64
        %v1505 = vpop.permute.xlu0 %1504
        %v1522 = vsel %vm613, %v1201, %v1475
        %v1523 = vsel %vm613, %v1206, %v1477
        %v1524 = vsel %vm613, %v1211, %v1479
        %v1525 = vsel %vm613, %v1216, %v1481
        %v1526 = vsel %vm613, %v1221, %v1483
        %v1527 = vsel %vm613, %v1226, %v1485
        %v1528 = vsel %vm613, %v1231, %v1487
        %v1529 = vsel %vm613, %v1236, %v1489
        %v1530 = vsel %vm613, %v1241, %v1491
        %v1531 = vsel %vm613, %v1246, %v1493
        %v1532 = vsel %vm613, %v1251, %v1495
        %v1533 = vsel %vm613, %v1256, %v1497
        %v1534 = vsel %vm613, %v1261, %v1499
        %v1535 = vsel %vm613, %v1266, %v1501
        %v1536 = vsel %vm613, %v1271, %v1503
        %v1537 = vsel %vm613, %v1276, %v1505
        %1538 = vst [vmem:[%s176 + $0x10] sm:$0xff] %v1522
        %1539 = vst [vmem:[%s176 + $0x30] sm:$0xff] %v1523
        %1540 = vst [vmem:[%s176 + $0x50] sm:$0xff] %v1524
        %1541 = vst [vmem:[%s176 + $0x70] sm:$0xff] %v1525
        %1542 = vst [vmem:[%s176 + $0x90] sm:$0xff] %v1526
        %1543 = vst [vmem:[%s176 + $0xb0] sm:$0xff] %v1527
        %1544 = vst [vmem:[%s176 + $0xd0] sm:$0xff] %v1528
        %1545 = vst [vmem:[%s176 + $0xf0] sm:$0xff] %v1529
        %1546 = vst [vmem:[%s176 + $0x110] sm:$0xff] %v1530
        %1547 = vst [vmem:[%s176 + $0x130] sm:$0xff] %v1531
        %1548 = vst [vmem:[%s176 + $0x150] sm:$0xff] %v1532
        %1549 = vst [vmem:[%s176 + $0x170] sm:$0xff] %v1533
        %1550 = vst [vmem:[%s176 + $0x190] sm:$0xff] %v1534
        %1551 = vst [vmem:[%s176 + $0x1b0] sm:$0xff] %v1535
        %1552 = vst [vmem:[%s176 + $0x1d0] sm:$0xff] %v1536
        %1553 = vst [vmem:[%s176 + $0x1f0] sm:$0xff] %v1537
        %s1554 = scalar_lea.vmem %s185, 768
        %v1555 = vld [vmem:[%s1554] sm:$0xff]
        %v1556 = vld [vmem:[%s1554 + $0x8] sm:$0xff]
        %v1557 = vld [vmem:[%s1554 + $0x10] sm:$0xff]
        %v1558 = vld [vmem:[%s1554 + $0x18] sm:$0xff]
        %v1559 = vld [vmem:[%s1554 + $0x20] sm:$0xff]
        %v1560 = vld [vmem:[%s1554 + $0x28] sm:$0xff]
        %v1561 = vld [vmem:[%s1554 + $0x30] sm:$0xff]
        %v1562 = vld [vmem:[%s1554 + $0x38] sm:$0xff]
        %v1563 = vld [vmem:[%s1554 + $0x40] sm:$0xff]
        %v1564 = vld [vmem:[%s1554 + $0x48] sm:$0xff]
        %v1565 = vld [vmem:[%s1554 + $0x50] sm:$0xff]
        %v1566 = vld [vmem:[%s1554 + $0x58] sm:$0xff]
        %v1567 = vld [vmem:[%s1554 + $0x60] sm:$0xff]
        %v1568 = vld [vmem:[%s1554 + $0x68] sm:$0xff]
        %v1569 = vld [vmem:[%s1554 + $0x70] sm:$0xff]
        %v1570 = vld [vmem:[%s1554 + $0x78] sm:$0xff]
        %s1571 = scalar_lea.vmem %s191, 768
        %v1572 = vld [vmem:[%s1571] sm:$0xff]
        %v1573 = vld [vmem:[%s1571 + $0x8] sm:$0xff]
        %v1574 = vld [vmem:[%s1571 + $0x10] sm:$0xff]
        %v1575 = vld [vmem:[%s1571 + $0x18] sm:$0xff]
        %v1576 = vld [vmem:[%s1571 + $0x20] sm:$0xff]
        %v1577 = vld [vmem:[%s1571 + $0x28] sm:$0xff]
        %v1578 = vld [vmem:[%s1571 + $0x30] sm:$0xff]
        %v1579 = vld [vmem:[%s1571 + $0x38] sm:$0xff]
        %v1580 = vld [vmem:[%s1571 + $0x40] sm:$0xff]
        %v1581 = vld [vmem:[%s1571 + $0x48] sm:$0xff]
        %v1582 = vld [vmem:[%s1571 + $0x50] sm:$0xff]
        %v1583 = vld [vmem:[%s1571 + $0x58] sm:$0xff]
        %v1584 = vld [vmem:[%s1571 + $0x60] sm:$0xff]
        %v1585 = vld [vmem:[%s1571 + $0x68] sm:$0xff]
        %v1586 = vld [vmem:[%s1571 + $0x70] sm:$0xff]
        %v1587 = vld [vmem:[%s1571 + $0x78] sm:$0xff]
        %1588 = vmatprep.subr.mxu0 0.0
        %1589 = vmatpush1.msra.mxu0 %v1572
        %1590 = vmatprep.subr.mxu0 0.0
        %1591 = vmatpush1.msra.mxu0 %v1573
        %1592 = vmatprep.subr.mxu0 0.0
        %1593 = vmatpush1.msra.mxu0 %v1574
        %1594 = vmatprep.subr.mxu0 0.0
        %1595 = vmatpush1.msra.mxu0 %v1575
        %1596 = vmatprep.subr.mxu0 0.0
        %1597 = vmatpush1.msra.mxu0 %v1576
        %1598 = vmatprep.subr.mxu0 0.0
        %1599 = vmatpush1.msra.mxu0 %v1577
        %1600 = vmatprep.subr.mxu0 0.0
        %1601 = vmatpush1.msra.mxu0 %v1578
        %1602 = vmatprep.subr.mxu0 0.0
        %1603 = vmatpush1.msra.mxu0 %v1579
        %1604 = vmatprep.subr.mxu0 0.0
        %1605 = vmatpush1.msra.mxu0 %v1580
        %1606 = vmatprep.subr.mxu0 0.0
        %1607 = vmatpush1.msra.mxu0 %v1581
        %1608 = vmatprep.subr.mxu0 0.0
        %1609 = vmatpush1.msra.mxu0 %v1582
        %1610 = vmatprep.subr.mxu0 0.0
        %1611 = vmatpush1.msra.mxu0 %v1583
        %1612 = vmatprep.subr.mxu0 0.0
        %1613 = vmatpush1.msra.mxu0 %v1584
        %1614 = vmatprep.subr.mxu0 0.0
        %1615 = vmatpush1.msra.mxu0 %v1585
        %1616 = vmatprep.subr.mxu0 0.0
        %1617 = vmatpush1.msra.mxu0 %v1586
        %1618 = vmatprep.subr.mxu0 0.0
        %1619 = vmatpush1.msra.mxu0 %v1587
        %1620 = vmatprep.subr.mxu0 0.0
        %1621 = vmatpush1.msra.mxu0 0.0
        %1622 = vmatprep.subr.mxu0 0.0
        %1623 = vmatpush1.msra.mxu0 0.0
        %1624 = vmatprep.subr.mxu0 0.0
        %1625 = vmatpush1.msra.mxu0 0.0
        %1626 = vmatprep.subr.mxu0 0.0
        %1627 = vmatpush1.msra.mxu0 0.0
        %1628 = vmatprep.subr.mxu0 0.0
        %1629 = vmatpush1.msra.mxu0 0.0
        %1630 = vmatprep.subr.mxu0 0.0
        %1631 = vmatpush1.msra.mxu0 0.0
        %1632 = vmatprep.subr.mxu0 0.0
        %1633 = vmatpush1.msra.mxu0 0.0
        %1634 = vmatprep.subr.mxu0 0.0
        %1635 = vmatpush1.msra.mxu0 0.0
        %1636 = vmatprep.subr.mxu0 0.0
        %1637 = vmatpush1.msra.mxu0 0.0
        %1638 = vmatprep.subr.mxu0 0.0
        %1639 = vmatpush1.msra.mxu0 0.0
        %1640 = vmatprep.subr.mxu0 0.0
        %1641 = vmatpush1.msra.mxu0 0.0
        %1642 = vmatprep.subr.mxu0 0.0
        %1643 = vmatpush1.msra.mxu0 0.0
        %1644 = vmatprep.subr.mxu0 0.0
        %1645 = vmatpush1.msra.mxu0 0.0
        %1646 = vmatprep.subr.mxu0 0.0
        %1647 = vmatpush1.msra.mxu0 0.0
        %1648 = vmatprep.subr.mxu0 0.0
        %1649 = vmatpush1.msra.mxu0 0.0
        %1650 = vmatprep.subr.mxu0 0.0
        %1651 = vmatpush1.msra.mxu0 0.0
        %1652 = vmatprep.mubr.f32.mxu0 0.0
        %1653 = vmatmul.mubr.f32.gmra.mrb[0].mxu0 %v1555
        %v1654 = vpop.f32.mrb[0].mxu0
        %v1655 = vadd.f32 0.0, %v1654
        %v1656 = vpop.f32.mrb[0].mxu0
        %1657 = vmatprep.mubr.f32.mxu0 0.0
        %1658 = vmatmul.mubr.f32.gmra.mrb[0].mxu0 %v1556
        %v1659 = vpop.f32.mrb[0].mxu0
        %v1660 = vadd.f32 0.0, %v1659
        %v1661 = vpop.f32.mrb[0].mxu0
        %1662 = vmatprep.mubr.f32.mxu0 0.0
        %1663 = vmatmul.mubr.f32.gmra.mrb[0].mxu0 %v1557
        %v1664 = vpop.f32.mrb[0].mxu0
        %v1665 = vadd.f32 0.0, %v1664
        %v1666 = vpop.f32.mrb[0].mxu0
        %1667 = vmatprep.mubr.f32.mxu0 0.0
        %1668 = vmatmul.mubr.f32.gmra.mrb[0].mxu0 %v1558
        %v1669 = vpop.f32.mrb[0].mxu0
        %v1670 = vadd.f32 0.0, %v1669
        %v1671 = vpop.f32.mrb[0].mxu0
        %1672 = vmatprep.mubr.f32.mxu0 0.0
        %1673 = vmatmul.mubr.f32.gmra.mrb[0].mxu0 %v1559
        %v1674 = vpop.f32.mrb[0].mxu0
        %v1675 = vadd.f32 0.0, %v1674
        %v1676 = vpop.f32.mrb[0].mxu0
        %1677 = vmatprep.mubr.f32.mxu0 0.0
        %1678 = vmatmul.mubr.f32.gmra.mrb[0].mxu0 %v1560
        %v1679 = vpop.f32.mrb[0].mxu0
        %v1680 = vadd.f32 0.0, %v1679
        %v1681 = vpop.f32.mrb[0].mxu0
        %1682 = vmatprep.mubr.f32.mxu0 0.0
        %1683 = vmatmul.mubr.f32.gmra.mrb[0].mxu0 %v1561
        %v1684 = vpop.f32.mrb[0].mxu0
        %v1685 = vadd.f32 0.0, %v1684
        %v1686 = vpop.f32.mrb[0].mxu0
        %1687 = vmatprep.mubr.f32.mxu0 0.0
        %1688 = vmatmul.mubr.f32.gmra.mrb[0].mxu0 %v1562
        %v1689 = vpop.f32.mrb[0].mxu0
        %v1690 = vadd.f32 0.0, %v1689
        %v1691 = vpop.f32.mrb[0].mxu0
        %1692 = vmatprep.mubr.f32.mxu0 0.0
        %1693 = vmatmul.mubr.f32.gmra.mrb[0].mxu0 %v1563
        %v1694 = vpop.f32.mrb[0].mxu0
        %v1695 = vadd.f32 0.0, %v1694
        %v1696 = vpop.f32.mrb[0].mxu0
        %1697 = vmatprep.mubr.f32.mxu0 0.0
        %1698 = vmatmul.mubr.f32.gmra.mrb[0].mxu0 %v1564
        %v1699 = vpop.f32.mrb[0].mxu0
        %v1700 = vadd.f32 0.0, %v1699
        %v1701 = vpop.f32.mrb[0].mxu0
        %1702 = vmatprep.mubr.f32.mxu0 0.0
        %1703 = vmatmul.mubr.f32.gmra.mrb[0].mxu0 %v1565
        %v1704 = vpop.f32.mrb[0].mxu0
        %v1705 = vadd.f32 0.0, %v1704
        %v1706 = vpop.f32.mrb[0].mxu0
        %1707 = vmatprep.mubr.f32.mxu0 0.0
        %1708 = vmatmul.mubr.f32.gmra.mrb[0].mxu0 %v1566
        %v1709 = vpop.f32.mrb[0].mxu0
        %v1710 = vadd.f32 0.0, %v1709
        %v1711 = vpop.f32.mrb[0].mxu0
        %1712 = vmatprep.mubr.f32.mxu0 0.0
        %1713 = vmatmul.mubr.f32.gmra.mrb[0].mxu0 %v1567
        %v1714 = vpop.f32.mrb[0].mxu0
        %v1715 = vadd.f32 0.0, %v1714
        %v1716 = vpop.f32.mrb[0].mxu0
        %1717 = vmatprep.mubr.f32.mxu0 0.0
        %1718 = vmatmul.mubr.f32.gmra.mrb[0].mxu0 %v1568
        %v1719 = vpop.f32.mrb[0].mxu0
        %v1720 = vadd.f32 0.0, %v1719
        %v1721 = vpop.f32.mrb[0].mxu0
        %1722 = vmatprep.mubr.f32.mxu0 0.0
        %1723 = vmatmul.mubr.f32.gmra.mrb[0].mxu0 %v1569
        %v1724 = vpop.f32.mrb[0].mxu0
        %v1725 = vadd.f32 0.0, %v1724
        %v1726 = vpop.f32.mrb[0].mxu0
        %1727 = vmatprep.mubr.f32.mxu0 0.0
        %1728 = vmatmul.mubr.f32.gmra.mrb[0].mxu0 %v1570
        %v1729 = vpop.f32.mrb[0].mxu0
        %v1730 = vadd.f32 0.0, %v1729
        %v1731 = vpop.f32.mrb[0].mxu0
        %1732 = vdwg.mxu0
        %s1733 = scalar_lea.vmem %s185, 896
        %v1734 = vld [vmem:[%s1733] sm:$0xff]
        %v1735 = vld [vmem:[%s1733 + $0x8] sm:$0xff]
        %v1736 = vld [vmem:[%s1733 + $0x10] sm:$0xff]
        %v1737 = vld [vmem:[%s1733 + $0x18] sm:$0xff]
        %v1738 = vld [vmem:[%s1733 + $0x20] sm:$0xff]
        %v1739 = vld [vmem:[%s1733 + $0x28] sm:$0xff]
        %v1740 = vld [vmem:[%s1733 + $0x30] sm:$0xff]
        %v1741 = vld [vmem:[%s1733 + $0x38] sm:$0xff]
        %v1742 = vld [vmem:[%s1733 + $0x40] sm:$0xff]
        %v1743 = vld [vmem:[%s1733 + $0x48] sm:$0xff]
        %v1744 = vld [vmem:[%s1733 + $0x50] sm:$0xff]
        %v1745 = vld [vmem:[%s1733 + $0x58] sm:$0xff]
        %v1746 = vld [vmem:[%s1733 + $0x60] sm:$0xff]
        %v1747 = vld [vmem:[%s1733 + $0x68] sm:$0xff]
        %v1748 = vld [vmem:[%s1733 + $0x70] sm:$0xff]
        %v1749 = vld [vmem:[%s1733 + $0x78] sm:$0xff]
        %s1750 = scalar_lea.vmem %s191, 896
        %v1751 = vld [vmem:[%s1750] sm:$0xff]
        %v1752 = vld [vmem:[%s1750 + $0x8] sm:$0xff]
        %v1753 = vld [vmem:[%s1750 + $0x10] sm:$0xff]
        %v1754 = vld [vmem:[%s1750 + $0x18] sm:$0xff]
        %v1755 = vld [vmem:[%s1750 + $0x20] sm:$0xff]
        %v1756 = vld [vmem:[%s1750 + $0x28] sm:$0xff]
        %v1757 = vld [vmem:[%s1750 + $0x30] sm:$0xff]
        %v1758 = vld [vmem:[%s1750 + $0x38] sm:$0xff]
        %v1759 = vld [vmem:[%s1750 + $0x40] sm:$0xff]
        %v1760 = vld [vmem:[%s1750 + $0x48] sm:$0xff]
        %v1761 = vld [vmem:[%s1750 + $0x50] sm:$0xff]
        %v1762 = vld [vmem:[%s1750 + $0x58] sm:$0xff]
        %v1763 = vld [vmem:[%s1750 + $0x60] sm:$0xff]
        %v1764 = vld [vmem:[%s1750 + $0x68] sm:$0xff]
        %v1765 = vld [vmem:[%s1750 + $0x70] sm:$0xff]
        %v1766 = vld [vmem:[%s1750 + $0x78] sm:$0xff]
        %1767 = vmatprep.subr.mxu0 0.0
        %1768 = vmatpush1.msra.mxu0 %v1751
        %1769 = vmatprep.subr.mxu0 0.0
        %1770 = vmatpush1.msra.mxu0 %v1752
        %1771 = vmatprep.subr.mxu0 0.0
        %1772 = vmatpush1.msra.mxu0 %v1753
        %1773 = vmatprep.subr.mxu0 0.0
        %1774 = vmatpush1.msra.mxu0 %v1754
        %1775 = vmatprep.subr.mxu0 0.0
        %1776 = vmatpush1.msra.mxu0 %v1755
        %1777 = vmatprep.subr.mxu0 0.0
        %1778 = vmatpush1.msra.mxu0 %v1756
        %1779 = vmatprep.subr.mxu0 0.0
        %1780 = vmatpush1.msra.mxu0 %v1757
        %1781 = vmatprep.subr.mxu0 0.0
        %1782 = vmatpush1.msra.mxu0 %v1758
        %1783 = vmatprep.subr.mxu0 0.0
        %1784 = vmatpush1.msra.mxu0 %v1759
        %1785 = vmatprep.subr.mxu0 0.0
        %1786 = vmatpush1.msra.mxu0 %v1760
        %1787 = vmatprep.subr.mxu0 0.0
        %1788 = vmatpush1.msra.mxu0 %v1761
        %1789 = vmatprep.subr.mxu0 0.0
        %1790 = vmatpush1.msra.mxu0 %v1762
        %1791 = vmatprep.subr.mxu0 0.0
        %1792 = vmatpush1.msra.mxu0 %v1763
        %1793 = vmatprep.subr.mxu0 0.0
        %1794 = vmatpush1.msra.mxu0 %v1764
        %1795 = vmatprep.subr.mxu0 0.0
        %1796 = vmatpush1.msra.mxu0 %v1765
        %1797 = vmatprep.subr.mxu0 0.0
        %1798 = vmatpush1.msra.mxu0 %v1766
        %1799 = vmatprep.subr.mxu0 0.0
        %1800 = vmatpush1.msra.mxu0 0.0
        %1801 = vmatprep.subr.mxu0 0.0
        %1802 = vmatpush1.msra.mxu0 0.0
        %1803 = vmatprep.subr.mxu0 0.0
        %1804 = vmatpush1.msra.mxu0 0.0
        %1805 = vmatprep.subr.mxu0 0.0
        %1806 = vmatpush1.msra.mxu0 0.0
        %1807 = vmatprep.subr.mxu0 0.0
        %1808 = vmatpush1.msra.mxu0 0.0
        %1809 = vmatprep.subr.mxu0 0.0
        %1810 = vmatpush1.msra.mxu0 0.0
        %1811 = vmatprep.subr.mxu0 0.0
        %1812 = vmatpush1.msra.mxu0 0.0
        %1813 = vmatprep.subr.mxu0 0.0
        %1814 = vmatpush1.msra.mxu0 0.0
        %1815 = vmatprep.subr.mxu0 0.0
        %1816 = vmatpush1.msra.mxu0 0.0
        %1817 = vmatprep.subr.mxu0 0.0
        %1818 = vmatpush1.msra.mxu0 0.0
        %1819 = vmatprep.subr.mxu0 0.0
        %1820 = vmatpush1.msra.mxu0 0.0
        %1821 = vmatprep.subr.mxu0 0.0
        %1822 = vmatpush1.msra.mxu0 0.0
        %1823 = vmatprep.subr.mxu0 0.0
        %1824 = vmatpush1.msra.mxu0 0.0
        %1825 = vmatprep.subr.mxu0 0.0
        %1826 = vmatpush1.msra.mxu0 0.0
        %1827 = vmatprep.subr.mxu0 0.0
        %1828 = vmatpush1.msra.mxu0 0.0
        %1829 = vmatprep.subr.mxu0 0.0
        %1830 = vmatpush1.msra.mxu0 0.0
        %1831 = vmatprep.mubr.f32.mxu0 0.0
        %1832 = vmatmul.mubr.f32.gmra.mrb[0].mxu0 %v1734
        %v1833 = vpop.f32.mrb[0].mxu0
        %v1834 = vadd.f32 0.0, %v1833
        %v1835 = vpop.f32.mrb[0].mxu0
        %1836 = vmatprep.mubr.f32.mxu0 0.0
        %1837 = vmatmul.mubr.f32.gmra.mrb[0].mxu0 %v1735
        %v1838 = vpop.f32.mrb[0].mxu0
        %v1839 = vadd.f32 0.0, %v1838
        %v1840 = vpop.f32.mrb[0].mxu0
        %1841 = vmatprep.mubr.f32.mxu0 0.0
        %1842 = vmatmul.mubr.f32.gmra.mrb[0].mxu0 %v1736
        %v1843 = vpop.f32.mrb[0].mxu0
        %v1844 = vadd.f32 0.0, %v1843
        %v1845 = vpop.f32.mrb[0].mxu0
        %1846 = vmatprep.mubr.f32.mxu0 0.0
        %1847 = vmatmul.mubr.f32.gmra.mrb[0].mxu0 %v1737
        %v1848 = vpop.f32.mrb[0].mxu0
        %v1849 = vadd.f32 0.0, %v1848
        %v1850 = vpop.f32.mrb[0].mxu0
        %1851 = vmatprep.mubr.f32.mxu0 0.0
        %1852 = vmatmul.mubr.f32.gmra.mrb[0].mxu0 %v1738
        %v1853 = vpop.f32.mrb[0].mxu0
        %v1854 = vadd.f32 0.0, %v1853
        %v1855 = vpop.f32.mrb[0].mxu0
        %1856 = vmatprep.mubr.f32.mxu0 0.0
        %1857 = vmatmul.mubr.f32.gmra.mrb[0].mxu0 %v1739
        %v1858 = vpop.f32.mrb[0].mxu0
        %v1859 = vadd.f32 0.0, %v1858
        %v1860 = vpop.f32.mrb[0].mxu0
        %1861 = vmatprep.mubr.f32.mxu0 0.0
        %1862 = vmatmul.mubr.f32.gmra.mrb[0].mxu0 %v1740
        %v1863 = vpop.f32.mrb[0].mxu0
        %v1864 = vadd.f32 0.0, %v1863
        %v1865 = vpop.f32.mrb[0].mxu0
        %1866 = vmatprep.mubr.f32.mxu0 0.0
        %1867 = vmatmul.mubr.f32.gmra.mrb[0].mxu0 %v1741
        %v1868 = vpop.f32.mrb[0].mxu0
        %v1869 = vadd.f32 0.0, %v1868
        %v1870 = vpop.f32.mrb[0].mxu0
        %1871 = vmatprep.mubr.f32.mxu0 0.0
        %1872 = vmatmul.mubr.f32.gmra.mrb[0].mxu0 %v1742
        %v1873 = vpop.f32.mrb[0].mxu0
        %v1874 = vadd.f32 0.0, %v1873
        %v1875 = vpop.f32.mrb[0].mxu0
        %1876 = vmatprep.mubr.f32.mxu0 0.0
        %1877 = vmatmul.mubr.f32.gmra.mrb[0].mxu0 %v1743
        %v1878 = vpop.f32.mrb[0].mxu0
        %v1879 = vadd.f32 0.0, %v1878
        %v1880 = vpop.f32.mrb[0].mxu0
        %1881 = vmatprep.mubr.f32.mxu0 0.0
        %1882 = vmatmul.mubr.f32.gmra.mrb[0].mxu0 %v1744
        %v1883 = vpop.f32.mrb[0].mxu0
        %v1884 = vadd.f32 0.0, %v1883
        %v1885 = vpop.f32.mrb[0].mxu0
        %1886 = vmatprep.mubr.f32.mxu0 0.0
        %1887 = vmatmul.mubr.f32.gmra.mrb[0].mxu0 %v1745
        %v1888 = vpop.f32.mrb[0].mxu0
        %v1889 = vadd.f32 0.0, %v1888
        %v1890 = vpop.f32.mrb[0].mxu0
        %1891 = vmatprep.mubr.f32.mxu0 0.0
        %1892 = vmatmul.mubr.f32.gmra.mrb[0].mxu0 %v1746
        %v1893 = vpop.f32.mrb[0].mxu0
        %v1894 = vadd.f32 0.0, %v1893
        %v1895 = vpop.f32.mrb[0].mxu0
        %1896 = vmatprep.mubr.f32.mxu0 0.0
        %1897 = vmatmul.mubr.f32.gmra.mrb[0].mxu0 %v1747
        %v1898 = vpop.f32.mrb[0].mxu0
        %v1899 = vadd.f32 0.0, %v1898
        %v1900 = vpop.f32.mrb[0].mxu0
        %1901 = vmatprep.mubr.f32.mxu0 0.0
        %1902 = vmatmul.mubr.f32.gmra.mrb[0].mxu0 %v1748
        %v1903 = vpop.f32.mrb[0].mxu0
        %v1904 = vadd.f32 0.0, %v1903
        %v1905 = vpop.f32.mrb[0].mxu0
        %1906 = vmatprep.mubr.f32.mxu0 0.0
        %1907 = vmatmul.mubr.f32.gmra.mrb[0].mxu0 %v1749
        %v1908 = vpop.f32.mrb[0].mxu0
        %v1909 = vadd.f32 0.0, %v1908
        %v1910 = vpop.f32.mrb[0].mxu0
        %1911 = vdwg.mxu0
        %1928 = vrot.lane.b32.xlu0 %v1834, 64
        %v1929 = vpop.permute.xlu0 %1928
        %1930 = vrot.lane.b32.xlu0 %v1839, 64
        %v1931 = vpop.permute.xlu0 %1930
        %1932 = vrot.lane.b32.xlu0 %v1844, 64
        %v1933 = vpop.permute.xlu0 %1932
        %1934 = vrot.lane.b32.xlu0 %v1849, 64
        %v1935 = vpop.permute.xlu0 %1934
        %1936 = vrot.lane.b32.xlu0 %v1854, 64
        %v1937 = vpop.permute.xlu0 %1936
        %1938 = vrot.lane.b32.xlu0 %v1859, 64
        %v1939 = vpop.permute.xlu0 %1938
        %1940 = vrot.lane.b32.xlu0 %v1864, 64
        %v1941 = vpop.permute.xlu0 %1940
        %1942 = vrot.lane.b32.xlu0 %v1869, 64
        %v1943 = vpop.permute.xlu0 %1942
        %1944 = vrot.lane.b32.xlu0 %v1874, 64
        %v1945 = vpop.permute.xlu0 %1944
        %1946 = vrot.lane.b32.xlu0 %v1879, 64
        %v1947 = vpop.permute.xlu0 %1946
        %1948 = vrot.lane.b32.xlu0 %v1884, 64
        %v1949 = vpop.permute.xlu0 %1948
        %1950 = vrot.lane.b32.xlu0 %v1889, 64
        %v1951 = vpop.permute.xlu0 %1950
        %1952 = vrot.lane.b32.xlu0 %v1894, 64
        %v1953 = vpop.permute.xlu0 %1952
        %1954 = vrot.lane.b32.xlu0 %v1899, 64
        %v1955 = vpop.permute.xlu0 %1954
        %1956 = vrot.lane.b32.xlu0 %v1904, 64
        %v1957 = vpop.permute.xlu0 %1956
        %1958 = vrot.lane.b32.xlu0 %v1909, 64
        %v1959 = vpop.permute.xlu0 %1958
        %v1976 = vsel %vm613, %v1655, %v1929
        %v1977 = vsel %vm613, %v1660, %v1931
        %v1978 = vsel %vm613, %v1665, %v1933
        %v1979 = vsel %vm613, %v1670, %v1935
        %v1980 = vsel %vm613, %v1675, %v1937
        %v1981 = vsel %vm613, %v1680, %v1939
        %v1982 = vsel %vm613, %v1685, %v1941
        %v1983 = vsel %vm613, %v1690, %v1943
        %v1984 = vsel %vm613, %v1695, %v1945
        %v1985 = vsel %vm613, %v1700, %v1947
        %v1986 = vsel %vm613, %v1705, %v1949
        %v1987 = vsel %vm613, %v1710, %v1951
        %v1988 = vsel %vm613, %v1715, %v1953
        %v1989 = vsel %vm613, %v1720, %v1955
        %v1990 = vsel %vm613, %v1725, %v1957
        %v1991 = vsel %vm613, %v1730, %v1959
        %1992 = vst [vmem:[%s176 + $0x18] sm:$0xff] %v1976
        %1993 = vst [vmem:[%s176 + $0x38] sm:$0xff] %v1977
        %1994 = vst [vmem:[%s176 + $0x58] sm:$0xff] %v1978
        %1995 = vst [vmem:[%s176 + $0x78] sm:$0xff] %v1979
        %1996 = vst [vmem:[%s176 + $0x98] sm:$0xff] %v1980
        %1997 = vst [vmem:[%s176 + $0xb8] sm:$0xff] %v1981
        %1998 = vst [vmem:[%s176 + $0xd8] sm:$0xff] %v1982
        %1999 = vst [vmem:[%s176 + $0xf8] sm:$0xff] %v1983
        %2000 = vst [vmem:[%s176 + $0x118] sm:$0xff] %v1984
        %2001 = vst [vmem:[%s176 + $0x138] sm:$0xff] %v1985
        %2002 = vst [vmem:[%s176 + $0x158] sm:$0xff] %v1986
        %2003 = vst [vmem:[%s176 + $0x178] sm:$0xff] %v1987
        %2004 = vst [vmem:[%s176 + $0x198] sm:$0xff] %v1988
        %2005 = vst [vmem:[%s176 + $0x1b8] sm:$0xff] %v1989
        %2006 = vst [vmem:[%s176 + $0x1d8] sm:$0xff] %v1990
        %2007 = vst [vmem:[%s176 + $0x1f8] sm:$0xff] %v1991
        %s2008 = sand.u32 %s92, 1
        %s2009 = scalar_lea.sflag [#allocation3], %s2008
        %s2010 = sand.u32 %s92, 1
        %s2011 = smul.addr %s2010, 512
        %s2012 = scalar_lea.vmem [#allocation2], %s2011
        // Predicated region
        $region29: #{tpu_custom_call.1} parent=27 // pred_check
          %p2013 = pneg %p102
        $region30: #{tpu_custom_call.1} parent=27 // pred_check_branch
          %2015 = sbr.rel (%p2013) target = $region32
        $region31: #{tpu_custom_call.1} parent=27 // pred_region
          %s2016 = smul.u32 16, %s21
          %s2018 = ssub.s32 8192, 8192
          %2019 = vsyncadd %s2009, %s2018
          %s2020 = smul.addr %s2016, 4
          %s2021 = smul.addr %s20, 64
          %s2022 = sadd.s32 %s2020, %s2021
          %s2023 = smul.addr %s2022, 128
          %s2024 = scalar_lea.hbm %s2, %s2023
          %s2025 = sshll.u32 %s2012, 4
          %s2026 = int_to_ptr.vmem [resolvable:$true] %s2025
          %2031 = dma.vmem_to_hbm [thread:$0]  %s2026, 8192, %s2024, %s2009, 512, 512, 32
        $region32: #{tpu_custom_call.1} parent=27 // pred_fallthru
          _
      $region28: #{tpu_custom_call.1} parent=5 // pred_fallthru
        _
      %p2032 = scmp.le.s32.totalorder 2, %s11
      // Predicated region
      $region33: #{tpu_custom_call.1} parent=5 // pred_check
        %p2033 = pneg %p2032
      $region34: #{tpu_custom_call.1} parent=5 // pred_check_branch
        %2035 = sbr.rel (%p2033) target = $region36
      $region35: #{tpu_custom_call.1} parent=5 // pred_region
        %s2036 = ssub.s32 %s11, 2
        // Predicated region
        $region37: #{tpu_custom_call.1} parent=35 // pred_check
          %p2037 = pneg %p108
        $region38: #{tpu_custom_call.1} parent=35 // pred_check_branch
          %2039 = sbr.rel (%p2037) target = $region40
        $region39: #{tpu_custom_call.1} parent=35 // pred_region
          %s2040 = sand.u32 %s93, 1
          %s2041 = scalar_lea.sflag [#allocation3], %s2040
          %s2042 = sand.u32 %s93, 1
          %s2043 = smul.addr %s2042, 512
          %s2044 = scalar_lea.vmem [#allocation2], %s2043
          %2045 = dma.done %s2041, 8192
        $region40: #{tpu_custom_call.1} parent=35 // pred_fallthru
          _
      $region36: #{tpu_custom_call.1} parent=5 // pred_fallthru
        _
    $region6: #{tpu_custom_call.1} parent=1 // loop_footer
      %s15 = sadd.s32 1, %s11
    $region7: #{tpu_custom_call.1} parent=1 // loop_footer_branch
      %10 = sbr.rel target = $region3
    $region8: #{tpu_custom_call.1} parent=1 // loop_exit
      _
    %2046 = vsyncpa [#allocation3], 1
    %s2047 = scalar_lea.sflag [#allocation3], 1
    %2048 = vsyncpa %s2047, 1

</llo_original>
